<compile_context>
chip_gen: v6e
topology: v6e:2x2x1
jax: 0.10.0
libtpu: 0.0.40
codegen_flags: <defaults>
</compile_context>

<pallas_src>
import functools

import jax
import jax.numpy as jnp
from jax.experimental import pallas as pl
from jax.experimental.pallas import tpu as pltpu

B = 4             # CFG.batch_size
IMG_EMB = 768     # CFG.image_embedding
TXT_EMB = 768     # CFG.text_embedding
PROJ = 256        # CFG.projection_dim
TEMPERATURE = 1.0 # CFG.temperature
LN_EPS = 1e-5     # torch nn.LayerNorm default eps


# ----------------------------- kernel helpers -------------------------------

def _gelu(x):
    # exact (erf-based) GELU, matching torch.nn.GELU() default
    inv_sqrt2 = jnp.float32(0.7071067811865475)
    return 0.5 * x * (1.0 + jax.lax.erf(x * inv_sqrt2))


def _log_softmax(x, axis):
    m = jnp.max(x, axis=axis, keepdims=True)
    s = x - m
    return s - jnp.log(jnp.sum(jnp.exp(s), axis=axis, keepdims=True))


# --------------------------------- kernel -----------------------------------

def clip_loss_kernel(feats_ref, w1_ref, w2_ref, vec_ref, loss_ref, *, temperature):
    """One grid step = one independent CLIP batch.

    feats_ref: [2B, E]  bf16   (image rows | text rows)  -- streamed per step
    w1_ref:    [E, 2P]  bf16   (img w1 | txt w1)          -- VMEM-resident
    w2_ref:    [P, 2P]  bf16   (img w2 | txt w2)          -- VMEM-resident
    vec_ref:   [8, P]   f32    rows: b1_i,b1_t,b2_i,b2_t,g_i,g_t,beta_i,beta_t
    loss_ref:  [N, 1]   f32 in SMEM (whole array resident; one scalar/step)
    """
    step = pl.program_id(0)
    nb2 = feats_ref.shape[0]          # 2B
    batch = nb2 // 2
    proj = vec_ref.shape[-1]

    feats = feats_ref[...]            # [2B, E] bf16
    w1 = w1_ref[...]                  # [E, 2P] bf16
    w2 = w2_ref[...]                  # [P, 2P] bf16

    row = jax.lax.broadcasted_iota(jnp.int32, (nb2, 1), 0)
    is_img = row < batch              # rows 0..B-1 -> image head, B..2B-1 -> text head

    # per-row parameters, broadcast/selected from the single aligned [8, P] tile
    b1 = jnp.where(is_img, vec_ref[0:1, :], vec_ref[1:2, :])      # [2B, P]
    b2 = jnp.where(is_img, vec_ref[2:3, :], vec_ref[3:4, :])
    gamma = jnp.where(is_img, vec_ref[4:5, :], vec_ref[5:6, :])
    beta = jnp.where(is_img, vec_ref[6:7, :], vec_ref[7:8, :])

    # ---- both ProjectionHeads, stacked (fills all 8 sublanes) ----
    # bf16 x bf16 on the MXU, f32 accumulation.
    full1 = jnp.dot(feats, w1, preferred_element_type=jnp.float32)        # [2B, 2P]
    projected = jnp.where(is_img, full1[:, :proj], full1[:, proj:]) + b1   # [2B, P] f32
    h = _gelu(projected)
    full2 = jnp.dot(h.astype(w2.dtype), w2, preferred_element_type=jnp.float32)
    fc = jnp.where(is_img, full2[:, :proj], full2[:, proj:]) + b2
    # nn.Dropout(p=0.1): identity in (deterministic) eval mode.
    # TODO(synk): training-mode dropout randomness not reproduced.
    y = fc + projected
    mean = jnp.mean(y, axis=-1, keepdims=True)
    var = jnp.mean((y - mean) ** 2, axis=-1, keepdims=True)
    emb = (y - mean) * jax.lax.rsqrt(var + LN_EPS) * gamma + beta          # [2B, P] f32

    # ---- one Gram matrix gives logits, images_similarity, texts_similarity ----
    contract_last = (((1,), (1,)), ((), ()))     # X @ Y.T without explicit transpose
    sim = jax.lax.dot_general(emb, emb, contract_last,
                              preferred_element_type=jnp.float32)          # [2B, 2B]

    # logits = text_embeddings @ image_embeddings.T / temperature
    logits = sim[batch:, :batch] * jnp.float32(1.0 / temperature)          # [B, B]
    # (images_similarity + texts_similarity) / 2 * temperature
    t_in = (sim[:batch, :batch] + sim[batch:, batch:]) * jnp.float32(0.5 * temperature)

    # targets = softmax(t_in, axis=-1)  (EUP reciprocal instead of VALU divide)
    t_max = jnp.max(t_in, axis=-1, keepdims=True)
    t_exp = jnp.exp(t_in - t_max)
    targets = t_exp * pl.reciprocal(jnp.sum(t_exp, axis=-1, keepdims=True), approx=True)

    # texts_loss  = (-targets   * log_softmax(logits,   dim=-1)).sum(1)
    # images_loss = (-targets.T * log_softmax(logits.T, dim=-1)).sum(1)
    # (transposed version computed as the axis-0 reduction — mathematically identical)
    texts_loss = jnp.sum(-targets * _log_softmax(logits, axis=1))
    images_loss = jnp.sum(-targets * _log_softmax(logits, axis=0))

    # loss = mean((images_loss + texts_loss) / 2)
    loss_ref[step, 0] = (texts_loss + images_loss) * jnp.float32(0.5 / batch)


# -------------------------------- wrappers ------------------------------------

def pack_params(params):
    """Pack the two ProjectionHeads into 3 DMA-friendly slabs. Call ONCE at init."""
    pi, pt = params["img"], params["txt"]
    w1 = jnp.concatenate([pi["w1"], pt["w1"]], axis=1).astype(jnp.bfloat16)   # [E, 2P]
    w2 = jnp.concatenate([pi["w2"], pt["w2"]], axis=1).astype(jnp.bfloat16)   # [P, 2P]
    vec = jnp.concatenate([pi["b1"], pt["b1"],
                           pi["b2"], pt["b2"],
                           pi["gamma"], pt["gamma"],
                           pi["beta"], pt["beta"]], axis=0).astype(jnp.float32)  # [8, P]
    return dict(w1=w1, w2=w2, vec=vec)


def clip_loss_steps(feats_steps, packed, temperature=TEMPERATURE):
    """Compute the CLIP loss for N independent batches stacked on the leading axis.

    feats_steps: [N, 2B, E] bf16 (image rows | text rows per step)
    Returns: [N] f32 losses. Weights are DMA'd once and stay VMEM-resident
    across the whole grid (constant block index).
    """
    w1, w2, vec = packed["w1"], packed["w2"], packed["vec"]
    n_steps, nb2, emb_dim = feats_steps.shape
    two_proj = w1.shape[1]
    proj = two_proj // 2
    assert w2.shape == (proj, two_proj) and vec.shape == (8, proj)

    flops = int(n_steps * (2 * nb2 * emb_dim * two_proj      # stacked layer-1 matmul
                           + 2 * nb2 * proj * two_proj       # stacked layer-2 matmul
                           + 2 * nb2 * proj * nb2            # Gram matrix
                           + 20 * nb2 * proj))               # elementwise
    bytes_accessed = int(n_steps * feats_steps.shape[1] * feats_steps.shape[2] * 2
                         + w1.size * 2 + w2.size * 2 + vec.size * 4 + n_steps * 4)
    transcendentals = int(n_steps * (nb2 * proj + 8 * nb2))  # erf + exp/log/rsqrt/recip

    kernel = functools.partial(clip_loss_kernel, temperature=float(temperature))
    losses = pl.pallas_call(
        kernel,
        out_shape=jax.ShapeDtypeStruct((n_steps, 1), jnp.float32),
        grid=(n_steps,),
        in_specs=[
            # per-step feature tile (leading step dim squeezed)
            pl.BlockSpec((None, nb2, emb_dim), lambda i: (i, 0, 0)),
            # weights: constant block index -> DMA'd once, VMEM-resident
            pl.BlockSpec((emb_dim, two_proj), lambda i: (0, 0)),
            pl.BlockSpec((proj, two_proj), lambda i: (0, 0)),
            pl.BlockSpec((8, proj), lambda i: (0, 0)),
        ],
        # scalar-per-step losses live in SMEM for the whole launch
        out_specs=pl.BlockSpec(memory_space=pltpu.MemorySpace.SMEM),
        compiler_params=pltpu.CompilerParams(dimension_semantics=("arbitrary",)),
        cost_estimate=pl.CostEstimate(flops=flops,
                                      transcendentals=transcendentals,
                                      bytes_accessed=bytes_accessed),
    )(feats_steps, w1, w2, vec)
    return losses[:, 0]


def clip_forward(image_features, text_features, packed, temperature=TEMPERATURE):
    """Single-batch CLIP loss (matches CLIPModel.forward)."""
    assert image_features.shape[-1] == text_features.shape[-1], (
        "packed path assumes equal image/text embedding dims (CFG uses 768 for both)")
    feats = jnp.concatenate([image_features, text_features], axis=0).astype(jnp.bfloat16)
    return clip_loss_steps(feats[None], packed, temperature=temperature)[0]


# --------------------------- pure-JAX reference ------------------------------

def _ref_projection_head(x, p):
    projected = x @ p["w1"] + p["b1"]
    h = jax.nn.gelu(projected, approximate=False)
    h = h @ p["w2"] + p["b2"]
    y = h + projected
    mean = jnp.mean(y, axis=-1, keepdims=True)
    var = jnp.mean((y - mean) ** 2, axis=-1, keepdims=True)
    return (y - mean) / jnp.sqrt(var + LN_EPS) * p["gamma"] + p["beta"]


def reference_loss(image_features, text_features, params, temperature=TEMPERATURE):
    image_embeddings = _ref_projection_head(image_features, params["img"])
    text_embeddings = _ref_projection_head(text_features, params["txt"])
    logits = text_embeddings @ image_embeddings.T / temperature
    images_similarity = image_embeddings @ image_embeddings.T
    texts_similarity = text_embeddings @ text_embeddings.T
    targets = jax.nn.softmax((images_similarity + texts_similarity) / 2 * temperature,
                             axis=-1)
    texts_loss = (-targets * jax.nn.log_softmax(logits, axis=-1)).sum(1)
    images_loss = (-targets.T * jax.nn.log_softmax(logits.T, axis=-1)).sum(1)
    return ((images_loss + texts_loss) / 2.0).mean()


# ------------------------------- param init ----------------------------------

def init_projection_head(key, embedding_dim, projection_dim=PROJ):
    k1, k2, k3, k4, k5, k6 = jax.random.split(key, 6)
    f32 = jnp.float32
    return dict(
        w1=jax.random.normal(k1, (embedding_dim, projection_dim), f32) * 0.02,
        b1=jax.random.normal(k2, (1, projection_dim), f32) * 0.02,
        w2=jax.random.normal(k3, (projection_dim, projection_dim), f32) * 0.02,
        b2=jax.random.normal(k4, (1, projection_dim), f32) * 0.02,
        gamma=1.0 + jax.random.normal(k5, (1, projection_dim), f32) * 0.01,
        beta=jax.random.normal(k6, (1, projection_dim), f32) * 0.01,
    )


if __name__ == "__main__":
    key = jax.random.PRNGKey(0)
    k_img, k_txt, k_ip, k_tp = jax.random.split(key, 4)

    # TODO(synk): pretrained timm ViT-B/16 (ImageEncoder) and DistilBERT
    # (TextEncoder) backbones are not reproducible in-script; their pooled
    # output features are supplied directly as inputs.
    image_features = jax.random.normal(k_img, (B, IMG_EMB), jnp.float32)
    text_features = jax.random.normal(k_txt, (B, TXT_EMB), jnp.float32)

    params = {
        "img": init_projection_head(k_ip, IMG_EMB),
        "txt": init_projection_head(k_tp, TXT_EMB),
    }

    packed = pack_params(params)     # one-time packing, hoisted out of the step

    loss = clip_forward(image_features, text_features, packed)
    loss = jax.block_until_ready(loss)

    ref = reference_loss(image_features, text_features, params)
    # bf16 weights over 768-length dot products + approx reciprocal -> 3e-2 tolerance
    assert jnp.allclose(loss, ref, rtol=3e-2, atol=3e-2), (float(loss), float(ref))

    print("KERNEL_OK")
</pallas_src>

<mosaic_0001>
module attributes {stable_mosaic.version = 11 : i64} {
  func.func @clip_loss_kernel(%arg0: i32, %arg1: memref<1x8x768xbf16, #tpu.memory_space<vmem>>, %arg2: memref<768x512xbf16, #tpu.memory_space<vmem>>, %arg3: memref<256x512xbf16, #tpu.memory_space<vmem>>, %arg4: memref<8x256xf32, #tpu.memory_space<vmem>>, %arg5: memref<1x1xf32, #tpu.memory_space<smem>>) attributes {dimension_semantics = [#tpu.dimension_semantics<arbitrary>], iteration_bounds = array<i64: 1>, scalar_prefetch = 0 : i64, scratch_operands = 0 : i64, tpu.core_type = #tpu.core_type<tc>, window_params = [{transform_indices = @transform_0, window_bounds = array<i64: 1, 8, 768>}, {pipeline_mode = #tpu.pipeline_mode<synchronous>, transform_indices = @transform_1, window_bounds = array<i64: 768, 512>}, {pipeline_mode = #tpu.pipeline_mode<synchronous>, transform_indices = @transform_2, window_bounds = array<i64: 256, 512>}, {pipeline_mode = #tpu.pipeline_mode<synchronous>, transform_indices = @transform_3, window_bounds = array<i64: 8, 256>}, {transform_indices = @transform_4, window_bounds = array<i64: 1, 1>}]} {
    %c0 = arith.constant 0 : index
    %c0_0 = arith.constant 0 : index
    %c0_1 = arith.constant 0 : index
    %0 = vector.load %arg1[%c0, %c0_0, %c0_1] : memref<1x8x768xbf16, #tpu.memory_space<vmem>>, vector<1x8x768xbf16>
    %1 = vector.shape_cast %0 : vector<1x8x768xbf16> to vector<8x768xbf16>
    %c0_2 = arith.constant 0 : index
    %c0_3 = arith.constant 0 : index
    %2 = vector.load %arg2[%c0_2, %c0_3] : memref<768x512xbf16, #tpu.memory_space<vmem>>, vector<768x512xbf16>
    %c0_4 = arith.constant 0 : index
    %c0_5 = arith.constant 0 : index
    %3 = vector.load %arg3[%c0_4, %c0_5] : memref<256x512xbf16, #tpu.memory_space<vmem>>, vector<256x512xbf16>
    %4 = tpu.iota {dimensions = array<i32: 0>} : vector<8x1xi32>
    %c4_i32 = arith.constant 4 : i32
    %5 = vector.broadcast %c4_i32 : i32 to vector<8x1xi32>
    %6 = arith.cmpi slt, %4, %5 : vector<8x1xi32>
    %c0_6 = arith.constant 0 : index
    %c0_7 = arith.constant 0 : index
    %7 = vector.load %arg4[%c0_6, %c0_7] : memref<8x256xf32, #tpu.memory_space<vmem>>, vector<1x256xf32>
    %c1 = arith.constant 1 : index
    %c0_8 = arith.constant 0 : index
    %8 = vector.load %arg4[%c1, %c0_8] : memref<8x256xf32, #tpu.memory_space<vmem>>, vector<1x256xf32>
    %9 = vector.shape_cast %6 : vector<8x1xi1> to vector<8x1xi1>
    %10 = vector.broadcast %9 : vector<8x1xi1> to vector<8x256xi1>
    %11 = vector.shape_cast %7 : vector<1x256xf32> to vector<1x256xf32>
    %12 = vector.broadcast %11 : vector<1x256xf32> to vector<8x256xf32>
    %13 = vector.shape_cast %8 : vector<1x256xf32> to vector<1x256xf32>
    %14 = vector.broadcast %13 : vector<1x256xf32> to vector<8x256xf32>
    %15 = arith.select %10, %12, %14 : vector<8x256xi1>, vector<8x256xf32>
    %c2 = arith.constant 2 : index
    %c0_9 = arith.constant 0 : index
    %16 = vector.load %arg4[%c2, %c0_9] : memref<8x256xf32, #tpu.memory_space<vmem>>, vector<1x256xf32>
    %c3 = arith.constant 3 : index
    %c0_10 = arith.constant 0 : index
    %17 = vector.load %arg4[%c3, %c0_10] : memref<8x256xf32, #tpu.memory_space<vmem>>, vector<1x256xf32>
    %18 = vector.shape_cast %6 : vector<8x1xi1> to vector<8x1xi1>
    %19 = vector.broadcast %18 : vector<8x1xi1> to vector<8x256xi1>
    %20 = vector.shape_cast %16 : vector<1x256xf32> to vector<1x256xf32>
    %21 = vector.broadcast %20 : vector<1x256xf32> to vector<8x256xf32>
    %22 = vector.shape_cast %17 : vector<1x256xf32> to vector<1x256xf32>
    %23 = vector.broadcast %22 : vector<1x256xf32> to vector<8x256xf32>
    %24 = arith.select %19, %21, %23 : vector<8x256xi1>, vector<8x256xf32>
    %c4 = arith.constant 4 : index
    %c0_11 = arith.constant 0 : index
    %25 = vector.load %arg4[%c4, %c0_11] : memref<8x256xf32, #tpu.memory_space<vmem>>, vector<1x256xf32>
    %c5 = arith.constant 5 : index
    %c0_12 = arith.constant 0 : index
    %26 = vector.load %arg4[%c5, %c0_12] : memref<8x256xf32, #tpu.memory_space<vmem>>, vector<1x256xf32>
    %27 = vector.shape_cast %6 : vector<8x1xi1> to vector<8x1xi1>
    %28 = vector.broadcast %27 : vector<8x1xi1> to vector<8x256xi1>
    %29 = vector.shape_cast %25 : vector<1x256xf32> to vector<1x256xf32>
    %30 = vector.broadcast %29 : vector<1x256xf32> to vector<8x256xf32>
    %31 = vector.shape_cast %26 : vector<1x256xf32> to vector<1x256xf32>
    %32 = vector.broadcast %31 : vector<1x256xf32> to vector<8x256xf32>
    %33 = arith.select %28, %30, %32 : vector<8x256xi1>, vector<8x256xf32>
    %c6 = arith.constant 6 : index
    %c0_13 = arith.constant 0 : index
    %34 = vector.load %arg4[%c6, %c0_13] : memref<8x256xf32, #tpu.memory_space<vmem>>, vector<1x256xf32>
    %c7 = arith.constant 7 : index
    %c0_14 = arith.constant 0 : index
    %35 = vector.load %arg4[%c7, %c0_14] : memref<8x256xf32, #tpu.memory_space<vmem>>, vector<1x256xf32>
    %36 = vector.shape_cast %6 : vector<8x1xi1> to vector<8x1xi1>
    %37 = vector.broadcast %36 : vector<8x1xi1> to vector<8x256xi1>
    %38 = vector.shape_cast %34 : vector<1x256xf32> to vector<1x256xf32>
    %39 = vector.broadcast %38 : vector<1x256xf32> to vector<8x256xf32>
    %40 = vector.shape_cast %35 : vector<1x256xf32> to vector<1x256xf32>
    %41 = vector.broadcast %40 : vector<1x256xf32> to vector<8x256xf32>
    %42 = arith.select %37, %39, %41 : vector<8x256xi1>, vector<8x256xf32>
    %cst = arith.constant dense<0.000000e+00> : vector<8x512xf32>
    %43 = tpu.matmul %1, %2, %cst {dimension_numbers = #tpu.dot_dimension_numbers<[1], [0], [0], [1], [0, 0, 1, 1], [], []>} : vector<8x768xbf16>, vector<768x512xbf16>, vector<8x512xf32> -> vector<8x512xf32>
    %44 = vector.extract_strided_slice %43 {offsets = [0, 0], sizes = [8, 256], strides = [1, 1]} : vector<8x512xf32> to vector<8x256xf32>
    %45 = vector.extract_strided_slice %43 {offsets = [0, 256], sizes = [8, 256], strides = [1, 1]} : vector<8x512xf32> to vector<8x256xf32>
    %46 = vector.shape_cast %6 : vector<8x1xi1> to vector<8x1xi1>
    %47 = vector.broadcast %46 : vector<8x1xi1> to vector<8x256xi1>
    %48 = arith.select %47, %44, %45 : vector<8x256xi1>, vector<8x256xf32>
    %49 = arith.addf %48, %15 : vector<8x256xf32>
    %cst_15 = arith.constant 5.000000e-01 : f32
    %50 = vector.broadcast %cst_15 : f32 to vector<8x256xf32>
    %51 = arith.mulf %50, %49 : vector<8x256xf32>
    %cst_16 = arith.constant 0.707106769 : f32
    %52 = vector.broadcast %cst_16 : f32 to vector<8x256xf32>
    %53 = arith.mulf %49, %52 : vector<8x256xf32>
    %54 = math.erf %53 : vector<8x256xf32>
    %cst_17 = arith.constant 1.000000e+00 : f32
    %55 = vector.broadcast %cst_17 : f32 to vector<8x256xf32>
    %56 = arith.addf %55, %54 : vector<8x256xf32>
    %57 = arith.mulf %51, %56 : vector<8x256xf32>
    %58 = arith.truncf %57 : vector<8x256xf32> to vector<8x256xbf16>
    %cst_18 = arith.constant dense<0.000000e+00> : vector<8x512xf32>
    %59 = tpu.matmul %58, %3, %cst_18 {dimension_numbers = #tpu.dot_dimension_numbers<[1], [0], [0], [1], [0, 0, 1, 1], [], []>} : vector<8x256xbf16>, vector<256x512xbf16>, vector<8x512xf32> -> vector<8x512xf32>
    %60 = vector.extract_strided_slice %59 {offsets = [0, 0], sizes = [8, 256], strides = [1, 1]} : vector<8x512xf32> to vector<8x256xf32>
    %61 = vector.extract_strided_slice %59 {offsets = [0, 256], sizes = [8, 256], strides = [1, 1]} : vector<8x512xf32> to vector<8x256xf32>
    %62 = vector.shape_cast %6 : vector<8x1xi1> to vector<8x1xi1>
    %63 = vector.broadcast %62 : vector<8x1xi1> to vector<8x256xi1>
    %64 = arith.select %63, %60, %61 : vector<8x256xi1>, vector<8x256xf32>
    %65 = arith.addf %64, %24 : vector<8x256xf32>
    %66 = arith.addf %65, %49 : vector<8x256xf32>
    %cst_19 = arith.constant dense<0.000000e+00> : vector<8xf32>
    %67 = vector.multi_reduction <add>, %66, %cst_19 [1] : vector<8x256xf32> to vector<8xf32>
    %68 = vector.shape_cast %67 : vector<8xf32> to vector<8x1xf32>
    %cst_20 = arith.constant 2.560000e+02 : f32
    %69 = vector.broadcast %cst_20 : f32 to vector<8x1xf32>
    %70 = arith.divf %68, %69 : vector<8x1xf32>
    %71 = vector.broadcast %70 : vector<8x1xf32> to vector<8x256xf32>
    %72 = arith.subf %66, %71 : vector<8x256xf32>
    %73 = arith.mulf %72, %72 : vector<8x256xf32>
    %cst_21 = arith.constant dense<0.000000e+00> : vector<8xf32>
    %74 = vector.multi_reduction <add>, %73, %cst_21 [1] : vector<8x256xf32> to vector<8xf32>
    %75 = vector.shape_cast %74 : vector<8xf32> to vector<8x1xf32>
    %cst_22 = arith.constant 2.560000e+02 : f32
    %76 = vector.broadcast %cst_22 : f32 to vector<8x1xf32>
    %77 = arith.divf %75, %76 : vector<8x1xf32>
    %78 = vector.broadcast %70 : vector<8x1xf32> to vector<8x256xf32>
    %79 = arith.subf %66, %78 : vector<8x256xf32>
    %cst_23 = arith.constant 9.99999974E-6 : f32
    %80 = vector.broadcast %cst_23 : f32 to vector<8x1xf32>
    %81 = arith.addf %77, %80 : vector<8x1xf32>
    %82 = math.rsqrt %81 : vector<8x1xf32>
    %83 = vector.broadcast %82 : vector<8x1xf32> to vector<8x256xf32>
    %84 = arith.mulf %79, %83 : vector<8x256xf32>
    %85 = arith.mulf %84, %33 : vector<8x256xf32>
    %86 = arith.addf %85, %42 : vector<8x256xf32>
    %cst_24 = arith.constant dense<0.000000e+00> : vector<8x8xf32>
    %87 = tpu.matmul %86, %86, %cst_24 {dimension_numbers = #tpu.dot_dimension_numbers<[1], [1], [0], [0], [0, 0, 1, 0], [], []>} : vector<8x256xf32>, vector<8x256xf32>, vector<8x8xf32> -> vector<8x8xf32>
    %88 = vector.extract_strided_slice %87 {offsets = [4, 0], sizes = [4, 4], strides = [1, 1]} : vector<8x8xf32> to vector<4x4xf32>
    %cst_25 = arith.constant 1.000000e+00 : f32
    %89 = vector.broadcast %cst_25 : f32 to vector<4x4xf32>
    %90 = arith.mulf %88, %89 : vector<4x4xf32>
    %91 = vector.extract_strided_slice %87 {offsets = [0, 0], sizes = [4, 4], strides = [1, 1]} : vector<8x8xf32> to vector<4x4xf32>
    %92 = vector.extract_strided_slice %87 {offsets = [4, 4], sizes = [4, 4], strides = [1, 1]} : vector<8x8xf32> to vector<4x4xf32>
    %93 = arith.addf %91, %92 : vector<4x4xf32>
    %cst_26 = arith.constant 5.000000e-01 : f32
    %94 = vector.broadcast %cst_26 : f32 to vector<4x4xf32>
    %95 = arith.mulf %93, %94 : vector<4x4xf32>
    %cst_27 = arith.constant dense<0xFF800000> : vector<4xf32>
    %96 = vector.multi_reduction <maximumf>, %95, %cst_27 [1] : vector<4x4xf32> to vector<4xf32>
    %97 = vector.shape_cast %96 : vector<4xf32> to vector<4x1xf32>
    %98 = vector.broadcast %97 : vector<4x1xf32> to vector<4x4xf32>
    %99 = arith.subf %95, %98 : vector<4x4xf32>
    %100 = math.exp %99 : vector<4x4xf32>
    %cst_28 = arith.constant dense<0.000000e+00> : vector<4xf32>
    %101 = vector.multi_reduction <add>, %100, %cst_28 [1] : vector<4x4xf32> to vector<4xf32>
    %102 = vector.shape_cast %101 : vector<4xf32> to vector<4x1xf32>
    %103 = tpu.reciprocal %102 {approx = true} : vector<4x1xf32> -> vector<4x1xf32>
    %104 = vector.broadcast %103 : vector<4x1xf32> to vector<4x4xf32>
    %105 = arith.mulf %100, %104 : vector<4x4xf32>
    %cst_29 = arith.constant 0.000000e+00 : f32
    %106 = vector.broadcast %cst_29 : f32 to vector<4x4xf32>
    %107 = arith.subf %106, %105 : vector<4x4xf32>
    %cst_30 = arith.constant dense<0xFF800000> : vector<4xf32>
    %108 = vector.multi_reduction <maximumf>, %90, %cst_30 [1] : vector<4x4xf32> to vector<4xf32>
    %109 = vector.shape_cast %108 : vector<4xf32> to vector<4x1xf32>
    %110 = vector.broadcast %109 : vector<4x1xf32> to vector<4x4xf32>
    %111 = arith.subf %90, %110 : vector<4x4xf32>
    %112 = math.exp %111 : vector<4x4xf32>
    %cst_31 = arith.constant dense<0.000000e+00> : vector<4xf32>
    %113 = vector.multi_reduction <add>, %112, %cst_31 [1] : vector<4x4xf32> to vector<4xf32>
    %114 = vector.shape_cast %113 : vector<4xf32> to vector<4x1xf32>
    %115 = math.log %114 : vector<4x1xf32>
    %116 = vector.broadcast %115 : vector<4x1xf32> to vector<4x4xf32>
    %117 = arith.subf %111, %116 : vector<4x4xf32>
    %118 = arith.mulf %107, %117 : vector<4x4xf32>
    %119 = vector.shape_cast %118 : vector<4x4xf32> to vector<1x4x4xf32>
    %cst_32 = arith.constant dense<0.000000e+00> : vector<1xf32>
    %120 = vector.multi_reduction <add>, %119, %cst_32 [1, 2] : vector<1x4x4xf32> to vector<1xf32>
    %121 = vector.shape_cast %120 : vector<1xf32> to vector<1x1x1xf32>
    %122 = vector.extract %121[0, 0, 0] : f32 from vector<1x1x1xf32>
    %cst_33 = arith.constant 0.000000e+00 : f32
    %123 = vector.broadcast %cst_33 : f32 to vector<4x4xf32>
    %124 = arith.subf %123, %105 : vector<4x4xf32>
    %cst_34 = arith.constant dense<0xFF800000> : vector<4xf32>
    %125 = vector.multi_reduction <maximumf>, %90, %cst_34 [0] : vector<4x4xf32> to vector<4xf32>
    %126 = vector.shape_cast %125 : vector<4xf32> to vector<1x4xf32>
    %127 = vector.broadcast %126 : vector<1x4xf32> to vector<4x4xf32>
    %128 = arith.subf %90, %127 : vector<4x4xf32>
    %129 = math.exp %128 : vector<4x4xf32>
    %cst_35 = arith.constant dense<0.000000e+00> : vector<4xf32>
    %130 = vector.multi_reduction <add>, %129, %cst_35 [0] : vector<4x4xf32> to vector<4xf32>
    %131 = vector.shape_cast %130 : vector<4xf32> to vector<1x4xf32>
    %132 = math.log %131 : vector<1x4xf32>
    %133 = vector.broadcast %132 : vector<1x4xf32> to vector<4x4xf32>
    %134 = arith.subf %128, %133 : vector<4x4xf32>
    %135 = arith.mulf %124, %134 : vector<4x4xf32>
    %136 = vector.shape_cast %135 : vector<4x4xf32> to vector<1x4x4xf32>
    %cst_36 = arith.constant dense<0.000000e+00> : vector<1xf32>
    %137 = vector.multi_reduction <add>, %136, %cst_36 [1, 2] : vector<1x4x4xf32> to vector<1xf32>
    %138 = vector.shape_cast %137 : vector<1xf32> to vector<1x1x1xf32>
    %139 = vector.extract %138[0, 0, 0] : f32 from vector<1x1x1xf32>
    %140 = arith.addf %122, %139 : f32
    %cst_37 = arith.constant 1.250000e-01 : f32
    %141 = arith.mulf %140, %cst_37 : f32
    %142 = arith.index_cast %arg0 : i32 to index
    %c0_38 = arith.constant 0 : index
    %143 = memref.load %arg5[%142, %c0_38] : memref<1x1xf32, #tpu.memory_space<smem>>
    memref.store %141, %arg5[%142, %c0_38] : memref<1x1xf32, #tpu.memory_space<smem>>
    return
  }
  func.func @transform_0(%arg0: i32) -> (i32, i32, i32) {
    %c0_i32 = arith.constant 0 : i32
    %c0_i32_0 = arith.constant 0 : i32
    %c0_i32_1 = arith.constant 0 : i32
    return %arg0, %c0_i32, %c0_i32_0 : i32, i32, i32
  }
  func.func @transform_1(%arg0: i32) -> (i32, i32) {
    %c0_i32 = arith.constant 0 : i32
    %c0_i32_0 = arith.constant 0 : i32
    %c0_i32_1 = arith.constant 0 : i32
    return %c0_i32, %c0_i32_0 : i32, i32
  }
  func.func @transform_2(%arg0: i32) -> (i32, i32) {
    %c0_i32 = arith.constant 0 : i32
    %c0_i32_0 = arith.constant 0 : i32
    %c0_i32_1 = arith.constant 0 : i32
    return %c0_i32, %c0_i32_0 : i32, i32
  }
  func.func @transform_3(%arg0: i32) -> (i32, i32) {
    %c0_i32 = arith.constant 0 : i32
    %c0_i32_0 = arith.constant 0 : i32
    %c0_i32_1 = arith.constant 0 : i32
    return %c0_i32, %c0_i32_0 : i32, i32
  }
  func.func @transform_4(%arg0: i32) -> (i32, i32) {
    %c0_i32 = arith.constant 0 : i32
    %c0_i32_0 = arith.constant 0 : i32
    %c0_i32_1 = arith.constant 0 : i32
    return %c0_i32, %c0_i32_0 : i32, i32
  }
}

</mosaic_0001>

<llo_original>
// kernel: tpu_custom_call.1
$region0: #{tpu_custom_call.1}
  #allocation0 [shape = 'u32[]', space=smem, size = 0x4, offset = 0x4, fixed_abs, tag = 'smem constant byte address 0x4 - core index']
  #allocation1 [shape = 'u32[144,128]{1,0:T(1,128)}', space=vmem, size = 0x12000, scoped, tag = 'internal scratch']
  %s0 = inlined_call_operand.hbm [shape: bf16[1,8,768], index: 0, kind: input, shape index: {}]
  %s1 = inlined_call_operand.hbm [shape: bf16[768,512], index: 1, kind: input, shape index: {}]
  %s2 = inlined_call_operand.hbm [shape: bf16[256,512], index: 2, kind: input, shape index: {}]
  %s3 = inlined_call_operand.hbm [shape: f32[8,256], index: 3, kind: input, shape index: {}]
  %s4 = inlined_call_operand.hbm [shape: f32[1,1], index: 4, kind: output, shape index: {}]
  %s5 = sld [smem:[#allocation0]]
  $region42: #{tpu_custom_call.1} parent=0
    _
  %s7 = ssub.s32 1, %s5
  %s8 = scalar_select 0, %s7, %s5
  $region1: #{tpu_custom_call.1} parent=0
    #allocation2 [shape = 'u8[12288]{0}', space=vmem, size = 0x3000, scoped, tag = 'input window, operand 0, single buffered']
    #allocation3 [shape = 's32[1]{0}', space=sflag, size = 0x4, scoped, tag = 'scoped memory for tpu_custom_call.1']
    #allocation4 [shape = 's32[1]{0}', space=sflag, size = 0x4, scoped, tag = 'scoped memory for tpu_custom_call.1']
    #allocation5 [shape = 'u8[786432]{0}', space=vmem, size = 0xc0000, scoped, tag = 'input window, operand 1, single buffered']
    #allocation6 [shape = 's32[1]{0}', space=sflag, size = 0x4, scoped, tag = 'scoped memory for tpu_custom_call.1']
    #allocation7 [shape = 'u8[262144]{0}', space=vmem, size = 0x40000, scoped, tag = 'input window, operand 2, single buffered']
    #allocation8 [shape = 'u8[8192]{0}', space=vmem, size = 0x2000, scoped, tag = 'input window, operand 3, single buffered']
    #allocation9 [shape = 's32[1]{0}', space=sflag, size = 0x4, scoped, tag = 'scoped memory for tpu_custom_call.1']
    #allocation10 [shape = 'u8[512]{0}', space=smem, size = 0x200, scoped, tag = 'output window, operand 0, single buffered']
    %9 = vsyncpa [#allocation3], 0
    %10 = vsyncpa [#allocation6], 0
    %11 = vsyncpa [#allocation9], 0
    %12 = vsyncpa [#allocation4], 0
    // Predicated region
    $region2: #{tpu_custom_call.1} parent=1 // pred_check
      _
    $region3: #{tpu_custom_call.1} parent=1 // pred_check_branch
      %14 = sbr.rel (0) target = $region5
    $region4: #{tpu_custom_call.1} parent=1 // pred_region
      %s16 = ssub.s32 384, 384
      %17 = vsyncadd [#allocation3], %s16
      %s19 = sshll.u32 [#allocation2], 4
      %s20 = int_to_ptr.vmem [resolvable:$true] %s19
      %22 = dma.hbm_to_vmem [thread:$0]  %s0, 384, %s20, [#allocation3]
    $region5: #{tpu_custom_call.1} parent=1 // pred_fallthru
      _
    // Predicated region
    $region6: #{tpu_custom_call.1} parent=1 // pred_check
      _
    $region7: #{tpu_custom_call.1} parent=1 // pred_check_branch
      %24 = sbr.rel (0) target = $region9
    $region8: #{tpu_custom_call.1} parent=1 // pred_region
      %s26 = ssub.s32 24576, 24576
      %27 = vsyncadd [#allocation6], %s26
      %s28 = sshll.u32 [#allocation5], 4
      %s29 = int_to_ptr.vmem [resolvable:$true] %s28
      %34 = dma.hbm_to_vmem [thread:$0]  %s1, 24576, %s29, [#allocation6], 256, 256, 16
    $region9: #{tpu_custom_call.1} parent=1 // pred_fallthru
      _
    // Predicated region
    $region10: #{tpu_custom_call.1} parent=1 // pred_check
      _
    $region11: #{tpu_custom_call.1} parent=1 // pred_check_branch
      %36 = sbr.rel (0) target = $region13
    $region12: #{tpu_custom_call.1} parent=1 // pred_region
      %s38 = ssub.s32 8192, 8192
      %39 = vsyncadd [#allocation6], %s38
      %s40 = sshll.u32 [#allocation7], 4
      %s41 = int_to_ptr.vmem [resolvable:$true] %s40
      %46 = dma.hbm_to_vmem [thread:$0]  %s2, 8192, %s41, [#allocation6], 256, 256, 16
    $region13: #{tpu_custom_call.1} parent=1 // pred_fallthru
      _
    // Predicated region
    $region14: #{tpu_custom_call.1} parent=1 // pred_check
      _
    $region15: #{tpu_custom_call.1} parent=1 // pred_check_branch
      %48 = sbr.rel (0) target = $region17
    $region16: #{tpu_custom_call.1} parent=1 // pred_region
      %s50 = ssub.s32 256, 256
      %51 = vsyncadd [#allocation9], %s50
      %s53 = sshll.u32 [#allocation8], 4
      %s54 = int_to_ptr.vmem [resolvable:$true] %s53
      %56 = dma.hbm_to_vmem [thread:$0]  %s3, 256, %s54, [#allocation9]
    $region17: #{tpu_custom_call.1} parent=1 // pred_fallthru
      _
    // Predicated region
    $region18: #{tpu_custom_call.1} parent=1 // pred_check
      _
    $region19: #{tpu_custom_call.1} parent=1 // pred_check_branch
      %58 = sbr.rel (0) target = $region21
    $region20: #{tpu_custom_call.1} parent=1 // pred_region
      %59 = dma.done [#allocation3], 384
    $region21: #{tpu_custom_call.1} parent=1 // pred_fallthru
      _
    // Predicated region
    $region22: #{tpu_custom_call.1} parent=1 // pred_check
      _
    $region23: #{tpu_custom_call.1} parent=1 // pred_check_branch
      %61 = sbr.rel (0) target = $region25
    $region24: #{tpu_custom_call.1} parent=1 // pred_region
      %62 = dma.done [#allocation6], 24576
    $region25: #{tpu_custom_call.1} parent=1 // pred_fallthru
      _
    // Predicated region
    $region26: #{tpu_custom_call.1} parent=1 // pred_check
      _
    $region27: #{tpu_custom_call.1} parent=1 // pred_check_branch
      %64 = sbr.rel (0) target = $region29
    $region28: #{tpu_custom_call.1} parent=1 // pred_region
      %65 = dma.done [#allocation6], 8192
    $region29: #{tpu_custom_call.1} parent=1 // pred_fallthru
      _
    // Predicated region
    $region30: #{tpu_custom_call.1} parent=1 // pred_check
      _
    $region31: #{tpu_custom_call.1} parent=1 // pred_check_branch
      %67 = sbr.rel (0) target = $region33
    $region32: #{tpu_custom_call.1} parent=1 // pred_region
      %68 = dma.done [#allocation9], 256
    $region33: #{tpu_custom_call.1} parent=1 // pred_fallthru
      _
    %v69 = vld [vmem:[#allocation2] sm:$0xff]
    %v70 = vld [vmem:[#allocation2 + $0x8] sm:$0xff]
    %v71 = vld [vmem:[#allocation2 + $0x10] sm:$0xff]
    %v72 = vld [vmem:[#allocation5] sm:$0xff]
    %v73 = vld [vmem:[#allocation5 + $0x8] sm:$0xff]
    %v74 = vld [vmem:[#allocation5 + $0x10] sm:$0xff]
    %v75 = vld [vmem:[#allocation5 + $0x18] sm:$0xff]
    %v76 = vld [vmem:[#allocation5 + $0x20] sm:$0xff]
    %v77 = vld [vmem:[#allocation5 + $0x28] sm:$0xff]
    %v78 = vld [vmem:[#allocation5 + $0x30] sm:$0xff]
    %v79 = vld [vmem:[#allocation5 + $0x38] sm:$0xff]
    %v80 = vld [vmem:[#allocation5 + $0x40] sm:$0xff]
    %v81 = vld [vmem:[#allocation5 + $0x48] sm:$0xff]
    %v82 = vld [vmem:[#allocation5 + $0x50] sm:$0xff]
    %v83 = vld [vmem:[#allocation5 + $0x58] sm:$0xff]
    %v84 = vld [vmem:[#allocation5 + $0x60] sm:$0xff]
    %v85 = vld [vmem:[#allocation5 + $0x68] sm:$0xff]
    %v86 = vld [vmem:[#allocation5 + $0x70] sm:$0xff]
    %v87 = vld [vmem:[#allocation5 + $0x78] sm:$0xff]
    %v88 = vld [vmem:[#allocation5 + $0x80] sm:$0xff]
    %v89 = vld [vmem:[#allocation5 + $0x88] sm:$0xff]
    %v90 = vld [vmem:[#allocation5 + $0x90] sm:$0xff]
    %v91 = vld [vmem:[#allocation5 + $0x98] sm:$0xff]
    %v92 = vld [vmem:[#allocation5 + $0xa0] sm:$0xff]
    %v93 = vld [vmem:[#allocation5 + $0xa8] sm:$0xff]
    %v94 = vld [vmem:[#allocation5 + $0xb0] sm:$0xff]
    %v95 = vld [vmem:[#allocation5 + $0xb8] sm:$0xff]
    %v96 = vld [vmem:[#allocation5 + $0xc0] sm:$0xff]
    %v97 = vld [vmem:[#allocation5 + $0xc8] sm:$0xff]
    %v98 = vld [vmem:[#allocation5 + $0xd0] sm:$0xff]
    %v99 = vld [vmem:[#allocation5 + $0xd8] sm:$0xff]
    %v100 = vld [vmem:[#allocation5 + $0xe0] sm:$0xff]
    %v101 = vld [vmem:[#allocation5 + $0xe8] sm:$0xff]
    %v102 = vld [vmem:[#allocation5 + $0xf0] sm:$0xff]
    %v103 = vld [vmem:[#allocation5 + $0xf8] sm:$0xff]
    %v104 = vld [vmem:[#allocation5 + $0x100] sm:$0xff]
    %v105 = vld [vmem:[#allocation5 + $0x108] sm:$0xff]
    %v106 = vld [vmem:[#allocation5 + $0x110] sm:$0xff]
    %v107 = vld [vmem:[#allocation5 + $0x118] sm:$0xff]
    %v108 = vld [vmem:[#allocation5 + $0x120] sm:$0xff]
    %v109 = vld [vmem:[#allocation5 + $0x128] sm:$0xff]
    %v110 = vld [vmem:[#allocation5 + $0x130] sm:$0xff]
    %v111 = vld [vmem:[#allocation5 + $0x138] sm:$0xff]
    %v112 = vld [vmem:[#allocation5 + $0x140] sm:$0xff]
    %v113 = vld [vmem:[#allocation5 + $0x148] sm:$0xff]
    %v114 = vld [vmem:[#allocation5 + $0x150] sm:$0xff]
    %v115 = vld [vmem:[#allocation5 + $0x158] sm:$0xff]
    %v116 = vld [vmem:[#allocation5 + $0x160] sm:$0xff]
    %v117 = vld [vmem:[#allocation5 + $0x168] sm:$0xff]
    %v118 = vld [vmem:[#allocation5 + $0x170] sm:$0xff]
    %v119 = vld [vmem:[#allocation5 + $0x178] sm:$0xff]
    %v120 = vld [vmem:[#allocation5 + $0x180] sm:$0xff]
    %v121 = vld [vmem:[#allocation5 + $0x188] sm:$0xff]
    %v122 = vld [vmem:[#allocation5 + $0x190] sm:$0xff]
    %v123 = vld [vmem:[#allocation5 + $0x198] sm:$0xff]
    %v124 = vld [vmem:[#allocation5 + $0x1a0] sm:$0xff]
    %v125 = vld [vmem:[#allocation5 + $0x1a8] sm:$0xff]
    %v126 = vld [vmem:[#allocation5 + $0x1b0] sm:$0xff]
    %v127 = vld [vmem:[#allocation5 + $0x1b8] sm:$0xff]
    %v128 = vld [vmem:[#allocation5 + $0x1c0] sm:$0xff]
    %v129 = vld [vmem:[#allocation5 + $0x1c8] sm:$0xff]
    %v130 = vld [vmem:[#allocation5 + $0x1d0] sm:$0xff]
    %v131 = vld [vmem:[#allocation5 + $0x1d8] sm:$0xff]
    %v132 = vld [vmem:[#allocation5 + $0x1e0] sm:$0xff]
    %v133 = vld [vmem:[#allocation5 + $0x1e8] sm:$0xff]
    %v134 = vld [vmem:[#allocation5 + $0x1f0] sm:$0xff]
    %v135 = vld [vmem:[#allocation5 + $0x1f8] sm:$0xff]
    %v136 = vld [vmem:[#allocation5 + $0x200] sm:$0xff]
    %v137 = vld [vmem:[#allocation5 + $0x208] sm:$0xff]
    %v138 = vld [vmem:[#allocation5 + $0x210] sm:$0xff]
    %v139 = vld [vmem:[#allocation5 + $0x218] sm:$0xff]
    %v140 = vld [vmem:[#allocation5 + $0x220] sm:$0xff]
    %v141 = vld [vmem:[#allocation5 + $0x228] sm:$0xff]
    %v142 = vld [vmem:[#allocation5 + $0x230] sm:$0xff]
    %v143 = vld [vmem:[#allocation5 + $0x238] sm:$0xff]
    %v144 = vld [vmem:[#allocation5 + $0x240] sm:$0xff]
    %v145 = vld [vmem:[#allocation5 + $0x248] sm:$0xff]
    %v146 = vld [vmem:[#allocation5 + $0x250] sm:$0xff]
    %v147 = vld [vmem:[#allocation5 + $0x258] sm:$0xff]
    %v148 = vld [vmem:[#allocation5 + $0x260] sm:$0xff]
    %v149 = vld [vmem:[#allocation5 + $0x268] sm:$0xff]
    %v150 = vld [vmem:[#allocation5 + $0x270] sm:$0xff]
    %v151 = vld [vmem:[#allocation5 + $0x278] sm:$0xff]
    %v152 = vld [vmem:[#allocation5 + $0x280] sm:$0xff]
    %v153 = vld [vmem:[#allocation5 + $0x288] sm:$0xff]
    %v154 = vld [vmem:[#allocation5 + $0x290] sm:$0xff]
    %v155 = vld [vmem:[#allocation5 + $0x298] sm:$0xff]
    %v156 = vld [vmem:[#allocation5 + $0x2a0] sm:$0xff]
    %v157 = vld [vmem:[#allocation5 + $0x2a8] sm:$0xff]
    %v158 = vld [vmem:[#allocation5 + $0x2b0] sm:$0xff]
    %v159 = vld [vmem:[#allocation5 + $0x2b8] sm:$0xff]
    %v160 = vld [vmem:[#allocation5 + $0x2c0] sm:$0xff]
    %v161 = vld [vmem:[#allocation5 + $0x2c8] sm:$0xff]
    %v162 = vld [vmem:[#allocation5 + $0x2d0] sm:$0xff]
    %v163 = vld [vmem:[#allocation5 + $0x2d8] sm:$0xff]
    %v164 = vld [vmem:[#allocation5 + $0x2e0] sm:$0xff]
    %v165 = vld [vmem:[#allocation5 + $0x2e8] sm:$0xff]
    %v166 = vld [vmem:[#allocation5 + $0x2f0] sm:$0xff]
    %v167 = vld [vmem:[#allocation5 + $0x2f8] sm:$0xff]
    %v168 = vld [vmem:[#allocation5 + $0x300] sm:$0xff]
    %v169 = vld [vmem:[#allocation5 + $0x308] sm:$0xff]
    %v170 = vld [vmem:[#allocation5 + $0x310] sm:$0xff]
    %v171 = vld [vmem:[#allocation5 + $0x318] sm:$0xff]
    %v172 = vld [vmem:[#allocation5 + $0x320] sm:$0xff]
    %v173 = vld [vmem:[#allocation5 + $0x328] sm:$0xff]
    %v174 = vld [vmem:[#allocation5 + $0x330] sm:$0xff]
    %v175 = vld [vmem:[#allocation5 + $0x338] sm:$0xff]
    %v176 = vld [vmem:[#allocation5 + $0x340] sm:$0xff]
    %v177 = vld [vmem:[#allocation5 + $0x348] sm:$0xff]
    %v178 = vld [vmem:[#allocation5 + $0x350] sm:$0xff]
    %v179 = vld [vmem:[#allocation5 + $0x358] sm:$0xff]
    %v180 = vld [vmem:[#allocation5 + $0x360] sm:$0xff]
    %v181 = vld [vmem:[#allocation5 + $0x368] sm:$0xff]
    %v182 = vld [vmem:[#allocation5 + $0x370] sm:$0xff]
    %v183 = vld [vmem:[#allocation5 + $0x378] sm:$0xff]
    %v184 = vld [vmem:[#allocation5 + $0x380] sm:$0xff]
    %v185 = vld [vmem:[#allocation5 + $0x388] sm:$0xff]
    %v186 = vld [vmem:[#allocation5 + $0x390] sm:$0xff]
    %v187 = vld [vmem:[#allocation5 + $0x398] sm:$0xff]
    %v188 = vld [vmem:[#allocation5 + $0x3a0] sm:$0xff]
    %v189 = vld [vmem:[#allocation5 + $0x3a8] sm:$0xff]
    %v190 = vld [vmem:[#allocation5 + $0x3b0] sm:$0xff]
    %v191 = vld [vmem:[#allocation5 + $0x3b8] sm:$0xff]
    %v192 = vld [vmem:[#allocation5 + $0x3c0] sm:$0xff]
    %v193 = vld [vmem:[#allocation5 + $0x3c8] sm:$0xff]
    %v194 = vld [vmem:[#allocation5 + $0x3d0] sm:$0xff]
    %v195 = vld [vmem:[#allocation5 + $0x3d8] sm:$0xff]
    %v196 = vld [vmem:[#allocation5 + $0x3e0] sm:$0xff]
    %v197 = vld [vmem:[#allocation5 + $0x3e8] sm:$0xff]
    %v198 = vld [vmem:[#allocation5 + $0x3f0] sm:$0xff]
    %v199 = vld [vmem:[#allocation5 + $0x3f8] sm:$0xff]
    %v200 = vld [vmem:[#allocation5 + $0x400] sm:$0xff]
    %v201 = vld [vmem:[#allocation5 + $0x408] sm:$0xff]
    %v202 = vld [vmem:[#allocation5 + $0x410] sm:$0xff]
    %v203 = vld [vmem:[#allocation5 + $0x418] sm:$0xff]
    %v204 = vld [vmem:[#allocation5 + $0x420] sm:$0xff]
    %v205 = vld [vmem:[#allocation5 + $0x428] sm:$0xff]
    %v206 = vld [vmem:[#allocation5 + $0x430] sm:$0xff]
    %v207 = vld [vmem:[#allocation5 + $0x438] sm:$0xff]
    %v208 = vld [vmem:[#allocation5 + $0x440] sm:$0xff]
    %v209 = vld [vmem:[#allocation5 + $0x448] sm:$0xff]
    %v210 = vld [vmem:[#allocation5 + $0x450] sm:$0xff]
    %v211 = vld [vmem:[#allocation5 + $0x458] sm:$0xff]
    %v212 = vld [vmem:[#allocation5 + $0x460] sm:$0xff]
    %v213 = vld [vmem:[#allocation5 + $0x468] sm:$0xff]
    %v214 = vld [vmem:[#allocation5 + $0x470] sm:$0xff]
    %v215 = vld [vmem:[#allocation5 + $0x478] sm:$0xff]
    %v216 = vld [vmem:[#allocation5 + $0x480] sm:$0xff]
    %v217 = vld [vmem:[#allocation5 + $0x488] sm:$0xff]
    %v218 = vld [vmem:[#allocation5 + $0x490] sm:$0xff]
    %v219 = vld [vmem:[#allocation5 + $0x498] sm:$0xff]
    %v220 = vld [vmem:[#allocation5 + $0x4a0] sm:$0xff]
    %v221 = vld [vmem:[#allocation5 + $0x4a8] sm:$0xff]
    %v222 = vld [vmem:[#allocation5 + $0x4b0] sm:$0xff]
    %v223 = vld [vmem:[#allocation5 + $0x4b8] sm:$0xff]
    %v224 = vld [vmem:[#allocation5 + $0x4c0] sm:$0xff]
    %v225 = vld [vmem:[#allocation5 + $0x4c8] sm:$0xff]
    %v226 = vld [vmem:[#allocation5 + $0x4d0] sm:$0xff]
    %v227 = vld [vmem:[#allocation5 + $0x4d8] sm:$0xff]
    %v228 = vld [vmem:[#allocation5 + $0x4e0] sm:$0xff]
    %v229 = vld [vmem:[#allocation5 + $0x4e8] sm:$0xff]
    %v230 = vld [vmem:[#allocation5 + $0x4f0] sm:$0xff]
    %v231 = vld [vmem:[#allocation5 + $0x4f8] sm:$0xff]
    %v232 = vld [vmem:[#allocation5 + $0x500] sm:$0xff]
    %v233 = vld [vmem:[#allocation5 + $0x508] sm:$0xff]
    %v234 = vld [vmem:[#allocation5 + $0x510] sm:$0xff]
    %v235 = vld [vmem:[#allocation5 + $0x518] sm:$0xff]
    %v236 = vld [vmem:[#allocation5 + $0x520] sm:$0xff]
    %v237 = vld [vmem:[#allocation5 + $0x528] sm:$0xff]
    %v238 = vld [vmem:[#allocation5 + $0x530] sm:$0xff]
    %v239 = vld [vmem:[#allocation5 + $0x538] sm:$0xff]
    %v240 = vld [vmem:[#allocation5 + $0x540] sm:$0xff]
    %v241 = vld [vmem:[#allocation5 + $0x548] sm:$0xff]
    %v242 = vld [vmem:[#allocation5 + $0x550] sm:$0xff]
    %v243 = vld [vmem:[#allocation5 + $0x558] sm:$0xff]
    %v244 = vld [vmem:[#allocation5 + $0x560] sm:$0xff]
    %v245 = vld [vmem:[#allocation5 + $0x568] sm:$0xff]
    %v246 = vld [vmem:[#allocation5 + $0x570] sm:$0xff]
    %v247 = vld [vmem:[#allocation5 + $0x578] sm:$0xff]
    %v248 = vld [vmem:[#allocation5 + $0x580] sm:$0xff]
    %v249 = vld [vmem:[#allocation5 + $0x588] sm:$0xff]
    %v250 = vld [vmem:[#allocation5 + $0x590] sm:$0xff]
    %v251 = vld [vmem:[#allocation5 + $0x598] sm:$0xff]
    %v252 = vld [vmem:[#allocation5 + $0x5a0] sm:$0xff]
    %v253 = vld [vmem:[#allocation5 + $0x5a8] sm:$0xff]
    %v254 = vld [vmem:[#allocation5 + $0x5b0] sm:$0xff]
    %v255 = vld [vmem:[#allocation5 + $0x5b8] sm:$0xff]
    %v256 = vld [vmem:[#allocation5 + $0x5c0] sm:$0xff]
    %v257 = vld [vmem:[#allocation5 + $0x5c8] sm:$0xff]
    %v258 = vld [vmem:[#allocation5 + $0x5d0] sm:$0xff]
    %v259 = vld [vmem:[#allocation5 + $0x5d8] sm:$0xff]
    %v260 = vld [vmem:[#allocation5 + $0x5e0] sm:$0xff]
    %v261 = vld [vmem:[#allocation5 + $0x5e8] sm:$0xff]
    %v262 = vld [vmem:[#allocation5 + $0x5f0] sm:$0xff]
    %v263 = vld [vmem:[#allocation5 + $0x5f8] sm:$0xff]
    %v264 = vld [vmem:[#allocation7] sm:$0xff]
    %v265 = vld [vmem:[#allocation7 + $0x8] sm:$0xff]
    %v266 = vld [vmem:[#allocation7 + $0x10] sm:$0xff]
    %v267 = vld [vmem:[#allocation7 + $0x18] sm:$0xff]
    %v268 = vld [vmem:[#allocation7 + $0x20] sm:$0xff]
    %v269 = vld [vmem:[#allocation7 + $0x28] sm:$0xff]
    %v270 = vld [vmem:[#allocation7 + $0x30] sm:$0xff]
    %v271 = vld [vmem:[#allocation7 + $0x38] sm:$0xff]
    %v272 = vld [vmem:[#allocation7 + $0x40] sm:$0xff]
    %v273 = vld [vmem:[#allocation7 + $0x48] sm:$0xff]
    %v274 = vld [vmem:[#allocation7 + $0x50] sm:$0xff]
    %v275 = vld [vmem:[#allocation7 + $0x58] sm:$0xff]
    %v276 = vld [vmem:[#allocation7 + $0x60] sm:$0xff]
    %v277 = vld [vmem:[#allocation7 + $0x68] sm:$0xff]
    %v278 = vld [vmem:[#allocation7 + $0x70] sm:$0xff]
    %v279 = vld [vmem:[#allocation7 + $0x78] sm:$0xff]
    %v280 = vld [vmem:[#allocation7 + $0x80] sm:$0xff]
    %v281 = vld [vmem:[#allocation7 + $0x88] sm:$0xff]
    %v282 = vld [vmem:[#allocation7 + $0x90] sm:$0xff]
    %v283 = vld [vmem:[#allocation7 + $0x98] sm:$0xff]
    %v284 = vld [vmem:[#allocation7 + $0xa0] sm:$0xff]
    %v285 = vld [vmem:[#allocation7 + $0xa8] sm:$0xff]
    %v286 = vld [vmem:[#allocation7 + $0xb0] sm:$0xff]
    %v287 = vld [vmem:[#allocation7 + $0xb8] sm:$0xff]
    %v288 = vld [vmem:[#allocation7 + $0xc0] sm:$0xff]
    %v289 = vld [vmem:[#allocation7 + $0xc8] sm:$0xff]
    %v290 = vld [vmem:[#allocation7 + $0xd0] sm:$0xff]
    %v291 = vld [vmem:[#allocation7 + $0xd8] sm:$0xff]
    %v292 = vld [vmem:[#allocation7 + $0xe0] sm:$0xff]
    %v293 = vld [vmem:[#allocation7 + $0xe8] sm:$0xff]
    %v294 = vld [vmem:[#allocation7 + $0xf0] sm:$0xff]
    %v295 = vld [vmem:[#allocation7 + $0xf8] sm:$0xff]
    %v296 = vld [vmem:[#allocation7 + $0x100] sm:$0xff]
    %v297 = vld [vmem:[#allocation7 + $0x108] sm:$0xff]
    %v298 = vld [vmem:[#allocation7 + $0x110] sm:$0xff]
    %v299 = vld [vmem:[#allocation7 + $0x118] sm:$0xff]
    %v300 = vld [vmem:[#allocation7 + $0x120] sm:$0xff]
    %v301 = vld [vmem:[#allocation7 + $0x128] sm:$0xff]
    %v302 = vld [vmem:[#allocation7 + $0x130] sm:$0xff]
    %v303 = vld [vmem:[#allocation7 + $0x138] sm:$0xff]
    %v304 = vld [vmem:[#allocation7 + $0x140] sm:$0xff]
    %v305 = vld [vmem:[#allocation7 + $0x148] sm:$0xff]
    %v306 = vld [vmem:[#allocation7 + $0x150] sm:$0xff]
    %v307 = vld [vmem:[#allocation7 + $0x158] sm:$0xff]
    %v308 = vld [vmem:[#allocation7 + $0x160] sm:$0xff]
    %v309 = vld [vmem:[#allocation7 + $0x168] sm:$0xff]
    %v310 = vld [vmem:[#allocation7 + $0x170] sm:$0xff]
    %v311 = vld [vmem:[#allocation7 + $0x178] sm:$0xff]
    %v312 = vld [vmem:[#allocation7 + $0x180] sm:$0xff]
    %v313 = vld [vmem:[#allocation7 + $0x188] sm:$0xff]
    %v314 = vld [vmem:[#allocation7 + $0x190] sm:$0xff]
    %v315 = vld [vmem:[#allocation7 + $0x198] sm:$0xff]
    %v316 = vld [vmem:[#allocation7 + $0x1a0] sm:$0xff]
    %v317 = vld [vmem:[#allocation7 + $0x1a8] sm:$0xff]
    %v318 = vld [vmem:[#allocation7 + $0x1b0] sm:$0xff]
    %v319 = vld [vmem:[#allocation7 + $0x1b8] sm:$0xff]
    %v320 = vld [vmem:[#allocation7 + $0x1c0] sm:$0xff]
    %v321 = vld [vmem:[#allocation7 + $0x1c8] sm:$0xff]
    %v322 = vld [vmem:[#allocation7 + $0x1d0] sm:$0xff]
    %v323 = vld [vmem:[#allocation7 + $0x1d8] sm:$0xff]
    %v324 = vld [vmem:[#allocation7 + $0x1e0] sm:$0xff]
    %v325 = vld [vmem:[#allocation7 + $0x1e8] sm:$0xff]
    %v326 = vld [vmem:[#allocation7 + $0x1f0] sm:$0xff]
    %v327 = vld [vmem:[#allocation7 + $0x1f8] sm:$0xff]
    %v328 = vlaneseq
    %v329 = vshrl.u32 %v328, 7
    %vm330 = vcmp.lt.s32.totalorder %v329, 4
    %v331 = vld [vmem:[#allocation8] ss:$8 sm:$0x3]
    %s332 = scalar_lea.vmem [#allocation8], 1
    %v333 = vld [vmem:[%s332] ss:$8 sm:$0x3]
    %v334 = vsel %vm330, 1, 0
    %vm335 = vcmp.eq.s32.totalorder %v334, 1
    %v337 = vlaneseq
    %v338 = vshrl.u32 %v337, 7
    %v339 = vsub.s32 0, %v338
    %v340 = vrot.slane %v331, %v339
    %v341 = vlaneseq
    %v342 = vshrl.u32 %v341, 7
    %v343 = vsub.s32 1, %v342
    %v344 = vrot.slane %v331, %v343
    %v348 = vlaneseq
    %v349 = vshrl.u32 %v348, 7
    %v350 = vsub.s32 0, %v349
    %v351 = vrot.slane %v333, %v350
    %v352 = vlaneseq
    %v353 = vshrl.u32 %v352, 7
    %v354 = vsub.s32 1, %v353
    %v355 = vrot.slane %v333, %v354
    %v358 = vsel %vm335, %v340, %v351
    %v359 = vsel %vm335, %v344, %v355
    %s360 = scalar_lea.vmem [#allocation8], 2
    %v361 = vld [vmem:[%s360] ss:$8 sm:$0x3]
    %s362 = scalar_lea.vmem [#allocation8], 3
    %v363 = vld [vmem:[%s362] ss:$8 sm:$0x3]
    %v365 = vlaneseq
    %v366 = vshrl.u32 %v365, 7
    %v367 = vsub.s32 0, %v366
    %v368 = vrot.slane %v361, %v367
    %v369 = vlaneseq
    %v370 = vshrl.u32 %v369, 7
    %v371 = vsub.s32 1, %v370
    %v372 = vrot.slane %v361, %v371
    %v376 = vlaneseq
    %v377 = vshrl.u32 %v376, 7
    %v378 = vsub.s32 0, %v377
    %v379 = vrot.slane %v363, %v378
    %v380 = vlaneseq
    %v381 = vshrl.u32 %v380, 7
    %v382 = vsub.s32 1, %v381
    %v383 = vrot.slane %v363, %v382
    %v386 = vsel %vm335, %v368, %v379
    %v387 = vsel %vm335, %v372, %v383
    %s388 = scalar_lea.vmem [#allocation8], 4
    %v389 = vld [vmem:[%s388] ss:$8 sm:$0x3]
    %s390 = scalar_lea.vmem [#allocation8], 5
    %v391 = vld [vmem:[%s390] ss:$8 sm:$0x3]
    %v393 = vlaneseq
    %v394 = vshrl.u32 %v393, 7
    %v395 = vsub.s32 0, %v394
    %v396 = vrot.slane %v389, %v395
    %v397 = vlaneseq
    %v398 = vshrl.u32 %v397, 7
    %v399 = vsub.s32 1, %v398
    %v400 = vrot.slane %v389, %v399
    %v404 = vlaneseq
    %v405 = vshrl.u32 %v404, 7
    %v406 = vsub.s32 0, %v405
    %v407 = vrot.slane %v391, %v406
    %v408 = vlaneseq
    %v409 = vshrl.u32 %v408, 7
    %v410 = vsub.s32 1, %v409
    %v411 = vrot.slane %v391, %v410
    %v414 = vsel %vm335, %v396, %v407
    %v415 = vsel %vm335, %v400, %v411
    %s416 = scalar_lea.vmem [#allocation8], 6
    %v417 = vld [vmem:[%s416] ss:$8 sm:$0x3]
    %s418 = scalar_lea.vmem [#allocation8], 7
    %v419 = vld [vmem:[%s418] ss:$8 sm:$0x3]
    %v421 = vlaneseq
    %v422 = vshrl.u32 %v421, 7
    %v423 = vsub.s32 0, %v422
    %v424 = vrot.slane %v417, %v423
    %v425 = vlaneseq
    %v426 = vshrl.u32 %v425, 7
    %v427 = vsub.s32 1, %v426
    %v428 = vrot.slane %v417, %v427
    %v432 = vlaneseq
    %v433 = vshrl.u32 %v432, 7
    %v434 = vsub.s32 0, %v433
    %v435 = vrot.slane %v419, %v434
    %v436 = vlaneseq
    %v437 = vshrl.u32 %v436, 7
    %v438 = vsub.s32 1, %v437
    %v439 = vrot.slane %v419, %v438
    %v442 = vsel %vm335, %v424, %v435
    %v443 = vsel %vm335, %v428, %v439
    %v447 = vunpack.c.l.b16 %v69
    %v448 = vunpack.c.h.b16 %v69
    %v449 = vunpack.c.l.b16 %v70
    %v450 = vunpack.c.h.b16 %v70
    %v451 = vunpack.c.l.b16 %v71
    %v452 = vunpack.c.h.b16 %v71
    %v453 = vpack.c.b16 %v447, %v447
    %v454 = vpack.c.b16 %v448, %v448
    %v455 = vpack.c.b16 %v449, %v449
    %v456 = vpack.c.b16 %v450, %v450
    %v457 = vpack.c.b16 %v451, %v451
    %v458 = vpack.c.b16 %v452, %v452
    %v657 = vunpack.c.l.b16 %v72
    %v658 = vunpack.c.h.b16 %v72
    %v659 = vunpack.c.l.b16 %v73
    %v660 = vunpack.c.h.b16 %v73
    %v661 = vunpack.c.l.b16 %v74
    %v662 = vunpack.c.h.b16 %v74
    %v663 = vunpack.c.l.b16 %v75
    %v664 = vunpack.c.h.b16 %v75
    %v665 = vunpack.c.l.b16 %v76
    %v666 = vunpack.c.h.b16 %v76
    %v667 = vunpack.c.l.b16 %v77
    %v668 = vunpack.c.h.b16 %v77
    %v669 = vunpack.c.l.b16 %v78
    %v670 = vunpack.c.h.b16 %v78
    %v671 = vunpack.c.l.b16 %v79
    %v672 = vunpack.c.h.b16 %v79
    %v673 = vunpack.c.l.b16 %v80
    %v674 = vunpack.c.h.b16 %v80
    %v675 = vunpack.c.l.b16 %v81
    %v676 = vunpack.c.h.b16 %v81
    %v677 = vunpack.c.l.b16 %v82
    %v678 = vunpack.c.h.b16 %v82
    %v679 = vunpack.c.l.b16 %v83
    %v680 = vunpack.c.h.b16 %v83
    %v681 = vunpack.c.l.b16 %v84
    %v682 = vunpack.c.h.b16 %v84
    %v683 = vunpack.c.l.b16 %v85
    %v684 = vunpack.c.h.b16 %v85
    %v685 = vunpack.c.l.b16 %v86
    %v686 = vunpack.c.h.b16 %v86
    %v687 = vunpack.c.l.b16 %v87
    %v688 = vunpack.c.h.b16 %v87
    %v689 = vunpack.c.l.b16 %v88
    %v690 = vunpack.c.h.b16 %v88
    %v691 = vunpack.c.l.b16 %v89
    %v692 = vunpack.c.h.b16 %v89
    %v693 = vunpack.c.l.b16 %v90
    %v694 = vunpack.c.h.b16 %v90
    %v695 = vunpack.c.l.b16 %v91
    %v696 = vunpack.c.h.b16 %v91
    %v697 = vunpack.c.l.b16 %v92
    %v698 = vunpack.c.h.b16 %v92
    %v699 = vunpack.c.l.b16 %v93
    %v700 = vunpack.c.h.b16 %v93
    %v701 = vunpack.c.l.b16 %v94
    %v702 = vunpack.c.h.b16 %v94
    %v703 = vunpack.c.l.b16 %v95
    %v704 = vunpack.c.h.b16 %v95
    %v705 = vunpack.c.l.b16 %v96
    %v706 = vunpack.c.h.b16 %v96
    %v707 = vunpack.c.l.b16 %v97
    %v708 = vunpack.c.h.b16 %v97
    %v709 = vunpack.c.l.b16 %v98
    %v710 = vunpack.c.h.b16 %v98
    %v711 = vunpack.c.l.b16 %v99
    %v712 = vunpack.c.h.b16 %v99
    %v713 = vunpack.c.l.b16 %v100
    %v714 = vunpack.c.h.b16 %v100
    %v715 = vunpack.c.l.b16 %v101
    %v716 = vunpack.c.h.b16 %v101
    %v717 = vunpack.c.l.b16 %v102
    %v718 = vunpack.c.h.b16 %v102
    %v719 = vunpack.c.l.b16 %v103
    %v720 = vunpack.c.h.b16 %v103
    %v721 = vunpack.c.l.b16 %v104
    %v722 = vunpack.c.h.b16 %v104
    %v723 = vunpack.c.l.b16 %v105
    %v724 = vunpack.c.h.b16 %v105
    %v725 = vunpack.c.l.b16 %v106
    %v726 = vunpack.c.h.b16 %v106
    %v727 = vunpack.c.l.b16 %v107
    %v728 = vunpack.c.h.b16 %v107
    %v729 = vunpack.c.l.b16 %v108
    %v730 = vunpack.c.h.b16 %v108
    %v731 = vunpack.c.l.b16 %v109
    %v732 = vunpack.c.h.b16 %v109
    %v733 = vunpack.c.l.b16 %v110
    %v734 = vunpack.c.h.b16 %v110
    %v735 = vunpack.c.l.b16 %v111
    %v736 = vunpack.c.h.b16 %v111
    %v737 = vunpack.c.l.b16 %v112
    %v738 = vunpack.c.h.b16 %v112
    %v739 = vunpack.c.l.b16 %v113
    %v740 = vunpack.c.h.b16 %v113
    %v741 = vunpack.c.l.b16 %v114
    %v742 = vunpack.c.h.b16 %v114
    %v743 = vunpack.c.l.b16 %v115
    %v744 = vunpack.c.h.b16 %v115
    %v745 = vunpack.c.l.b16 %v116
    %v746 = vunpack.c.h.b16 %v116
    %v747 = vunpack.c.l.b16 %v117
    %v748 = vunpack.c.h.b16 %v117
    %v749 = vunpack.c.l.b16 %v118
    %v750 = vunpack.c.h.b16 %v118
    %v751 = vunpack.c.l.b16 %v119
    %v752 = vunpack.c.h.b16 %v119
    %v753 = vunpack.c.l.b16 %v120
    %v754 = vunpack.c.h.b16 %v120
    %v755 = vunpack.c.l.b16 %v121
    %v756 = vunpack.c.h.b16 %v121
    %v757 = vunpack.c.l.b16 %v122
    %v758 = vunpack.c.h.b16 %v122
    %v759 = vunpack.c.l.b16 %v123
    %v760 = vunpack.c.h.b16 %v123
    %v761 = vunpack.c.l.b16 %v124
    %v762 = vunpack.c.h.b16 %v124
    %v763 = vunpack.c.l.b16 %v125
    %v764 = vunpack.c.h.b16 %v125
    %v765 = vunpack.c.l.b16 %v126
    %v766 = vunpack.c.h.b16 %v126
    %v767 = vunpack.c.l.b16 %v127
    %v768 = vunpack.c.h.b16 %v127
    %v769 = vunpack.c.l.b16 %v128
    %v770 = vunpack.c.h.b16 %v128
    %v771 = vunpack.c.l.b16 %v129
    %v772 = vunpack.c.h.b16 %v129
    %v773 = vunpack.c.l.b16 %v130
    %v774 = vunpack.c.h.b16 %v130
    %v775 = vunpack.c.l.b16 %v131
    %v776 = vunpack.c.h.b16 %v131
    %v777 = vunpack.c.l.b16 %v132
    %v778 = vunpack.c.h.b16 %v132
    %v779 = vunpack.c.l.b16 %v133
    %v780 = vunpack.c.h.b16 %v133
    %v781 = vunpack.c.l.b16 %v134
    %v782 = vunpack.c.h.b16 %v134
    %v783 = vunpack.c.l.b16 %v135
    %v784 = vunpack.c.h.b16 %v135
    %v785 = vunpack.c.l.b16 %v136
    %v786 = vunpack.c.h.b16 %v136
    %v787 = vunpack.c.l.b16 %v137
    %v788 = vunpack.c.h.b16 %v137
    %v789 = vunpack.c.l.b16 %v138
    %v790 = vunpack.c.h.b16 %v138
    %v791 = vunpack.c.l.b16 %v139
    %v792 = vunpack.c.h.b16 %v139
    %v793 = vunpack.c.l.b16 %v140
    %v794 = vunpack.c.h.b16 %v140
    %v795 = vunpack.c.l.b16 %v141
    %v796 = vunpack.c.h.b16 %v141
    %v797 = vunpack.c.l.b16 %v142
    %v798 = vunpack.c.h.b16 %v142
    %v799 = vunpack.c.l.b16 %v143
    %v800 = vunpack.c.h.b16 %v143
    %v801 = vunpack.c.l.b16 %v144
    %v802 = vunpack.c.h.b16 %v144
    %v803 = vunpack.c.l.b16 %v145
    %v804 = vunpack.c.h.b16 %v145
    %v805 = vunpack.c.l.b16 %v146
    %v806 = vunpack.c.h.b16 %v146
    %v807 = vunpack.c.l.b16 %v147
    %v808 = vunpack.c.h.b16 %v147
    %v809 = vunpack.c.l.b16 %v148
    %v810 = vunpack.c.h.b16 %v148
    %v811 = vunpack.c.l.b16 %v149
    %v812 = vunpack.c.h.b16 %v149
    %v813 = vunpack.c.l.b16 %v150
    %v814 = vunpack.c.h.b16 %v150
    %v815 = vunpack.c.l.b16 %v151
    %v816 = vunpack.c.h.b16 %v151
    %v817 = vunpack.c.l.b16 %v152
    %v818 = vunpack.c.h.b16 %v152
    %v819 = vunpack.c.l.b16 %v153
    %v820 = vunpack.c.h.b16 %v153
    %v821 = vunpack.c.l.b16 %v154
    %v822 = vunpack.c.h.b16 %v154
    %v823 = vunpack.c.l.b16 %v155
    %v824 = vunpack.c.h.b16 %v155
    %v825 = vunpack.c.l.b16 %v156
    %v826 = vunpack.c.h.b16 %v156
    %v827 = vunpack.c.l.b16 %v157
    %v828 = vunpack.c.h.b16 %v157
    %v829 = vunpack.c.l.b16 %v158
    %v830 = vunpack.c.h.b16 %v158
    %v831 = vunpack.c.l.b16 %v159
    %v832 = vunpack.c.h.b16 %v159
    %v833 = vunpack.c.l.b16 %v160
    %v834 = vunpack.c.h.b16 %v160
    %v835 = vunpack.c.l.b16 %v161
    %v836 = vunpack.c.h.b16 %v161
    %v837 = vunpack.c.l.b16 %v162
    %v838 = vunpack.c.h.b16 %v162
    %v839 = vunpack.c.l.b16 %v163
    %v840 = vunpack.c.h.b16 %v163
    %v841 = vunpack.c.l.b16 %v164
    %v842 = vunpack.c.h.b16 %v164
    %v843 = vunpack.c.l.b16 %v165
    %v844 = vunpack.c.h.b16 %v165
    %v845 = vunpack.c.l.b16 %v166
    %v846 = vunpack.c.h.b16 %v166
    %v847 = vunpack.c.l.b16 %v167
    %v848 = vunpack.c.h.b16 %v167
    %v849 = vunpack.c.l.b16 %v168
    %v850 = vunpack.c.h.b16 %v168
    %v851 = vunpack.c.l.b16 %v169
    %v852 = vunpack.c.h.b16 %v169
    %v853 = vunpack.c.l.b16 %v170
    %v854 = vunpack.c.h.b16 %v170
    %v855 = vunpack.c.l.b16 %v171
    %v856 = vunpack.c.h.b16 %v171
    %v857 = vunpack.c.l.b16 %v172
    %v858 = vunpack.c.h.b16 %v172
    %v859 = vunpack.c.l.b16 %v173
    %v860 = vunpack.c.h.b16 %v173
    %v861 = vunpack.c.l.b16 %v174
    %v862 = vunpack.c.h.b16 %v174
    %v863 = vunpack.c.l.b16 %v175
    %v864 = vunpack.c.h.b16 %v175
    %v865 = vunpack.c.l.b16 %v176
    %v866 = vunpack.c.h.b16 %v176
    %v867 = vunpack.c.l.b16 %v177
    %v868 = vunpack.c.h.b16 %v177
    %v869 = vunpack.c.l.b16 %v178
    %v870 = vunpack.c.h.b16 %v178
    %v871 = vunpack.c.l.b16 %v179
    %v872 = vunpack.c.h.b16 %v179
    %v873 = vunpack.c.l.b16 %v180
    %v874 = vunpack.c.h.b16 %v180
    %v875 = vunpack.c.l.b16 %v181
    %v876 = vunpack.c.h.b16 %v181
    %v877 = vunpack.c.l.b16 %v182
    %v878 = vunpack.c.h.b16 %v182
    %v879 = vunpack.c.l.b16 %v183
    %v880 = vunpack.c.h.b16 %v183
    %v881 = vunpack.c.l.b16 %v184
    %v882 = vunpack.c.h.b16 %v184
    %v883 = vunpack.c.l.b16 %v185
    %v884 = vunpack.c.h.b16 %v185
    %v885 = vunpack.c.l.b16 %v186
    %v886 = vunpack.c.h.b16 %v186
    %v887 = vunpack.c.l.b16 %v187
    %v888 = vunpack.c.h.b16 %v187
    %v889 = vunpack.c.l.b16 %v188
    %v890 = vunpack.c.h.b16 %v188
    %v891 = vunpack.c.l.b16 %v189
    %v892 = vunpack.c.h.b16 %v189
    %v893 = vunpack.c.l.b16 %v190
    %v894 = vunpack.c.h.b16 %v190
    %v895 = vunpack.c.l.b16 %v191
    %v896 = vunpack.c.h.b16 %v191
    %v897 = vunpack.c.l.b16 %v192
    %v898 = vunpack.c.h.b16 %v192
    %v899 = vunpack.c.l.b16 %v193
    %v900 = vunpack.c.h.b16 %v193
    %v901 = vunpack.c.l.b16 %v194
    %v902 = vunpack.c.h.b16 %v194
    %v903 = vunpack.c.l.b16 %v195
    %v904 = vunpack.c.h.b16 %v195
    %v905 = vunpack.c.l.b16 %v196
    %v906 = vunpack.c.h.b16 %v196
    %v907 = vunpack.c.l.b16 %v197
    %v908 = vunpack.c.h.b16 %v197
    %v909 = vunpack.c.l.b16 %v198
    %v910 = vunpack.c.h.b16 %v198
    %v911 = vunpack.c.l.b16 %v199
    %v912 = vunpack.c.h.b16 %v199
    %v913 = vunpack.c.l.b16 %v200
    %v914 = vunpack.c.h.b16 %v200
    %v915 = vunpack.c.l.b16 %v201
    %v916 = vunpack.c.h.b16 %v201
    %v917 = vunpack.c.l.b16 %v202
    %v918 = vunpack.c.h.b16 %v202
    %v919 = vunpack.c.l.b16 %v203
    %v920 = vunpack.c.h.b16 %v203
    %v921 = vunpack.c.l.b16 %v204
    %v922 = vunpack.c.h.b16 %v204
    %v923 = vunpack.c.l.b16 %v205
    %v924 = vunpack.c.h.b16 %v205
    %v925 = vunpack.c.l.b16 %v206
    %v926 = vunpack.c.h.b16 %v206
    %v927 = vunpack.c.l.b16 %v207
    %v928 = vunpack.c.h.b16 %v207
    %v929 = vunpack.c.l.b16 %v208
    %v930 = vunpack.c.h.b16 %v208
    %v931 = vunpack.c.l.b16 %v209
    %v932 = vunpack.c.h.b16 %v209
    %v933 = vunpack.c.l.b16 %v210
    %v934 = vunpack.c.h.b16 %v210
    %v935 = vunpack.c.l.b16 %v211
    %v936 = vunpack.c.h.b16 %v211
    %v937 = vunpack.c.l.b16 %v212
    %v938 = vunpack.c.h.b16 %v212
    %v939 = vunpack.c.l.b16 %v213
    %v940 = vunpack.c.h.b16 %v213
    %v941 = vunpack.c.l.b16 %v214
    %v942 = vunpack.c.h.b16 %v214
    %v943 = vunpack.c.l.b16 %v215
    %v944 = vunpack.c.h.b16 %v215
    %v945 = vunpack.c.l.b16 %v216
    %v946 = vunpack.c.h.b16 %v216
    %v947 = vunpack.c.l.b16 %v217
    %v948 = vunpack.c.h.b16 %v217
    %v949 = vunpack.c.l.b16 %v218
    %v950 = vunpack.c.h.b16 %v218
    %v951 = vunpack.c.l.b16 %v219
    %v952 = vunpack.c.h.b16 %v219
    %v953 = vunpack.c.l.b16 %v220
    %v954 = vunpack.c.h.b16 %v220
    %v955 = vunpack.c.l.b16 %v221
    %v956 = vunpack.c.h.b16 %v221
    %v957 = vunpack.c.l.b16 %v222
    %v958 = vunpack.c.h.b16 %v222
    %v959 = vunpack.c.l.b16 %v223
    %v960 = vunpack.c.h.b16 %v223
    %v961 = vunpack.c.l.b16 %v224
    %v962 = vunpack.c.h.b16 %v224
    %v963 = vunpack.c.l.b16 %v225
    %v964 = vunpack.c.h.b16 %v225
    %v965 = vunpack.c.l.b16 %v226
    %v966 = vunpack.c.h.b16 %v226
    %v967 = vunpack.c.l.b16 %v227
    %v968 = vunpack.c.h.b16 %v227
    %v969 = vunpack.c.l.b16 %v228
    %v970 = vunpack.c.h.b16 %v228
    %v971 = vunpack.c.l.b16 %v229
    %v972 = vunpack.c.h.b16 %v229
    %v973 = vunpack.c.l.b16 %v230
    %v974 = vunpack.c.h.b16 %v230
    %v975 = vunpack.c.l.b16 %v231
    %v976 = vunpack.c.h.b16 %v231
    %v977 = vunpack.c.l.b16 %v232
    %v978 = vunpack.c.h.b16 %v232
    %v979 = vunpack.c.l.b16 %v233
    %v980 = vunpack.c.h.b16 %v233
    %v981 = vunpack.c.l.b16 %v234
    %v982 = vunpack.c.h.b16 %v234
    %v983 = vunpack.c.l.b16 %v235
    %v984 = vunpack.c.h.b16 %v235
    %v985 = vunpack.c.l.b16 %v236
    %v986 = vunpack.c.h.b16 %v236
    %v987 = vunpack.c.l.b16 %v237
    %v988 = vunpack.c.h.b16 %v237
    %v989 = vunpack.c.l.b16 %v238
    %v990 = vunpack.c.h.b16 %v238
    %v991 = vunpack.c.l.b16 %v239
    %v992 = vunpack.c.h.b16 %v239
    %v993 = vunpack.c.l.b16 %v240
    %v994 = vunpack.c.h.b16 %v240
    %v995 = vunpack.c.l.b16 %v241
    %v996 = vunpack.c.h.b16 %v241
    %v997 = vunpack.c.l.b16 %v242
    %v998 = vunpack.c.h.b16 %v242
    %v999 = vunpack.c.l.b16 %v243
    %v1000 = vunpack.c.h.b16 %v243
    %v1001 = vunpack.c.l.b16 %v244
    %v1002 = vunpack.c.h.b16 %v244
    %v1003 = vunpack.c.l.b16 %v245
    %v1004 = vunpack.c.h.b16 %v245
    %v1005 = vunpack.c.l.b16 %v246
    %v1006 = vunpack.c.h.b16 %v246
    %v1007 = vunpack.c.l.b16 %v247
    %v1008 = vunpack.c.h.b16 %v247
    %v1009 = vunpack.c.l.b16 %v248
    %v1010 = vunpack.c.h.b16 %v248
    %v1011 = vunpack.c.l.b16 %v249
    %v1012 = vunpack.c.h.b16 %v249
    %v1013 = vunpack.c.l.b16 %v250
    %v1014 = vunpack.c.h.b16 %v250
    %v1015 = vunpack.c.l.b16 %v251
    %v1016 = vunpack.c.h.b16 %v251
    %v1017 = vunpack.c.l.b16 %v252
    %v1018 = vunpack.c.h.b16 %v252
    %v1019 = vunpack.c.l.b16 %v253
    %v1020 = vunpack.c.h.b16 %v253
    %v1021 = vunpack.c.l.b16 %v254
    %v1022 = vunpack.c.h.b16 %v254
    %v1023 = vunpack.c.l.b16 %v255
    %v1024 = vunpack.c.h.b16 %v255
    %v1025 = vunpack.c.l.b16 %v256
    %v1026 = vunpack.c.h.b16 %v256
    %v1027 = vunpack.c.l.b16 %v257
    %v1028 = vunpack.c.h.b16 %v257
    %v1029 = vunpack.c.l.b16 %v258
    %v1030 = vunpack.c.h.b16 %v258
    %v1031 = vunpack.c.l.b16 %v259
    %v1032 = vunpack.c.h.b16 %v259
    %v1033 = vunpack.c.l.b16 %v260
    %v1034 = vunpack.c.h.b16 %v260
    %v1035 = vunpack.c.l.b16 %v261
    %v1036 = vunpack.c.h.b16 %v261
    %v1037 = vunpack.c.l.b16 %v262
    %v1038 = vunpack.c.h.b16 %v262
    %v1039 = vunpack.c.l.b16 %v263
    %v1040 = vunpack.c.h.b16 %v263
    %v1041 = vpack.c.b16 %v661, %v657
    %v1042 = vpack.c.b16 %v662, %v658
    %v1043 = vpack.c.b16 %v663, %v659
    %v1044 = vpack.c.b16 %v664, %v660
    %v1045 = vpack.c.b16 %v669, %v665
    %v1046 = vpack.c.b16 %v670, %v666
    %v1047 = vpack.c.b16 %v671, %v667
    %v1048 = vpack.c.b16 %v672, %v668
    %v1049 = vpack.c.b16 %v677, %v673
    %v1050 = vpack.c.b16 %v678, %v674
    %v1051 = vpack.c.b16 %v679, %v675
    %v1052 = vpack.c.b16 %v680, %v676
    %v1053 = vpack.c.b16 %v685, %v681
    %v1054 = vpack.c.b16 %v686, %v682
    %v1055 = vpack.c.b16 %v687, %v683
    %v1056 = vpack.c.b16 %v688, %v684
    %v1057 = vpack.c.b16 %v693, %v689
    %v1058 = vpack.c.b16 %v694, %v690
    %v1059 = vpack.c.b16 %v695, %v691
    %v1060 = vpack.c.b16 %v696, %v692
    %v1061 = vpack.c.b16 %v701, %v697
    %v1062 = vpack.c.b16 %v702, %v698
    %v1063 = vpack.c.b16 %v703, %v699
    %v1064 = vpack.c.b16 %v704, %v700
    %v1065 = vpack.c.b16 %v709, %v705
    %v1066 = vpack.c.b16 %v710, %v706
    %v1067 = vpack.c.b16 %v711, %v707
    %v1068 = vpack.c.b16 %v712, %v708
    %v1069 = vpack.c.b16 %v717, %v713
    %v1070 = vpack.c.b16 %v718, %v714
    %v1071 = vpack.c.b16 %v719, %v715
    %v1072 = vpack.c.b16 %v720, %v716
    %v1073 = vpack.c.b16 %v725, %v721
    %v1074 = vpack.c.b16 %v726, %v722
    %v1075 = vpack.c.b16 %v727, %v723
    %v1076 = vpack.c.b16 %v728, %v724
    %v1077 = vpack.c.b16 %v733, %v729
    %v1078 = vpack.c.b16 %v734, %v730
    %v1079 = vpack.c.b16 %v735, %v731
    %v1080 = vpack.c.b16 %v736, %v732
    %v1081 = vpack.c.b16 %v741, %v737
    %v1082 = vpack.c.b16 %v742, %v738
    %v1083 = vpack.c.b16 %v743, %v739
    %v1084 = vpack.c.b16 %v744, %v740
    %v1085 = vpack.c.b16 %v749, %v745
    %v1086 = vpack.c.b16 %v750, %v746
    %v1087 = vpack.c.b16 %v751, %v747
    %v1088 = vpack.c.b16 %v752, %v748
    %v1089 = vpack.c.b16 %v757, %v753
    %v1090 = vpack.c.b16 %v758, %v754
    %v1091 = vpack.c.b16 %v759, %v755
    %v1092 = vpack.c.b16 %v760, %v756
    %v1093 = vpack.c.b16 %v765, %v761
    %v1094 = vpack.c.b16 %v766, %v762
    %v1095 = vpack.c.b16 %v767, %v763
    %v1096 = vpack.c.b16 %v768, %v764
    %v1097 = vpack.c.b16 %v773, %v769
    %v1098 = vpack.c.b16 %v774, %v770
    %v1099 = vpack.c.b16 %v775, %v771
    %v1100 = vpack.c.b16 %v776, %v772
    %v1101 = vpack.c.b16 %v781, %v777
    %v1102 = vpack.c.b16 %v782, %v778
    %v1103 = vpack.c.b16 %v783, %v779
    %v1104 = vpack.c.b16 %v784, %v780
    %v1105 = vpack.c.b16 %v789, %v785
    %v1106 = vpack.c.b16 %v790, %v786
    %v1107 = vpack.c.b16 %v791, %v787
    %v1108 = vpack.c.b16 %v792, %v788
    %v1109 = vpack.c.b16 %v797, %v793
    %v1110 = vpack.c.b16 %v798, %v794
    %v1111 = vpack.c.b16 %v799, %v795
    %v1112 = vpack.c.b16 %v800, %v796
    %v1113 = vpack.c.b16 %v805, %v801
    %v1114 = vpack.c.b16 %v806, %v802
    %v1115 = vpack.c.b16 %v807, %v803
    %v1116 = vpack.c.b16 %v808, %v804
    %v1117 = vpack.c.b16 %v813, %v809
    %v1118 = vpack.c.b16 %v814, %v810
    %v1119 = vpack.c.b16 %v815, %v811
    %v1120 = vpack.c.b16 %v816, %v812
    %v1121 = vpack.c.b16 %v821, %v817
    %v1122 = vpack.c.b16 %v822, %v818
    %v1123 = vpack.c.b16 %v823, %v819
    %v1124 = vpack.c.b16 %v824, %v820
    %v1125 = vpack.c.b16 %v829, %v825
    %v1126 = vpack.c.b16 %v830, %v826
    %v1127 = vpack.c.b16 %v831, %v827
    %v1128 = vpack.c.b16 %v832, %v828
    %v1129 = vpack.c.b16 %v837, %v833
    %v1130 = vpack.c.b16 %v838, %v834
    %v1131 = vpack.c.b16 %v839, %v835
    %v1132 = vpack.c.b16 %v840, %v836
    %v1133 = vpack.c.b16 %v845, %v841
    %v1134 = vpack.c.b16 %v846, %v842
    %v1135 = vpack.c.b16 %v847, %v843
    %v1136 = vpack.c.b16 %v848, %v844
    %v1137 = vpack.c.b16 %v853, %v849
    %v1138 = vpack.c.b16 %v854, %v850
    %v1139 = vpack.c.b16 %v855, %v851
    %v1140 = vpack.c.b16 %v856, %v852
    %v1141 = vpack.c.b16 %v861, %v857
    %v1142 = vpack.c.b16 %v862, %v858
    %v1143 = vpack.c.b16 %v863, %v859
    %v1144 = vpack.c.b16 %v864, %v860
    %v1145 = vpack.c.b16 %v869, %v865
    %v1146 = vpack.c.b16 %v870, %v866
    %v1147 = vpack.c.b16 %v871, %v867
    %v1148 = vpack.c.b16 %v872, %v868
    %v1149 = vpack.c.b16 %v877, %v873
    %v1150 = vpack.c.b16 %v878, %v874
    %v1151 = vpack.c.b16 %v879, %v875
    %v1152 = vpack.c.b16 %v880, %v876
    %v1153 = vpack.c.b16 %v885, %v881
    %v1154 = vpack.c.b16 %v886, %v882
    %v1155 = vpack.c.b16 %v887, %v883
    %v1156 = vpack.c.b16 %v888, %v884
    %v1157 = vpack.c.b16 %v893, %v889
    %v1158 = vpack.c.b16 %v894, %v890
    %v1159 = vpack.c.b16 %v895, %v891
    %v1160 = vpack.c.b16 %v896, %v892
    %v1161 = vpack.c.b16 %v901, %v897
    %v1162 = vpack.c.b16 %v902, %v898
    %v1163 = vpack.c.b16 %v903, %v899
    %v1164 = vpack.c.b16 %v904, %v900
    %v1165 = vpack.c.b16 %v909, %v905
    %v1166 = vpack.c.b16 %v910, %v906
    %v1167 = vpack.c.b16 %v911, %v907
    %v1168 = vpack.c.b16 %v912, %v908
    %v1169 = vpack.c.b16 %v917, %v913
    %v1170 = vpack.c.b16 %v918, %v914
    %v1171 = vpack.c.b16 %v919, %v915
    %v1172 = vpack.c.b16 %v920, %v916
    %v1173 = vpack.c.b16 %v925, %v921
    %v1174 = vpack.c.b16 %v926, %v922
    %v1175 = vpack.c.b16 %v927, %v923
    %v1176 = vpack.c.b16 %v928, %v924
    %v1177 = vpack.c.b16 %v933, %v929
    %v1178 = vpack.c.b16 %v934, %v930
    %v1179 = vpack.c.b16 %v935, %v931
    %v1180 = vpack.c.b16 %v936, %v932
    %v1181 = vpack.c.b16 %v941, %v937
    %v1182 = vpack.c.b16 %v942, %v938
    %v1183 = vpack.c.b16 %v943, %v939
    %v1184 = vpack.c.b16 %v944, %v940
    %v1185 = vpack.c.b16 %v949, %v945
    %v1186 = vpack.c.b16 %v950, %v946
    %v1187 = vpack.c.b16 %v951, %v947
    %v1188 = vpack.c.b16 %v952, %v948
    %v1189 = vpack.c.b16 %v957, %v953
    %v1190 = vpack.c.b16 %v958, %v954
    %v1191 = vpack.c.b16 %v959, %v955
    %v1192 = vpack.c.b16 %v960, %v956
    %v1193 = vpack.c.b16 %v965, %v961
    %v1194 = vpack.c.b16 %v966, %v962
    %v1195 = vpack.c.b16 %v967, %v963
    %v1196 = vpack.c.b16 %v968, %v964
    %v1197 = vpack.c.b16 %v973, %v969
    %v1198 = vpack.c.b16 %v974, %v970
    %v1199 = vpack.c.b16 %v975, %v971
    %v1200 = vpack.c.b16 %v976, %v972
    %v1201 = vpack.c.b16 %v981, %v977
    %v1202 = vpack.c.b16 %v982, %v978
    %v1203 = vpack.c.b16 %v983, %v979
    %v1204 = vpack.c.b16 %v984, %v980
    %v1205 = vpack.c.b16 %v989, %v985
    %v1206 = vpack.c.b16 %v990, %v986
    %v1207 = vpack.c.b16 %v991, %v987
    %v1208 = vpack.c.b16 %v992, %v988
    %v1209 = vpack.c.b16 %v997, %v993
    %v1210 = vpack.c.b16 %v998, %v994
    %v1211 = vpack.c.b16 %v999, %v995
    %v1212 = vpack.c.b16 %v1000, %v996
    %v1213 = vpack.c.b16 %v1005, %v1001
    %v1214 = vpack.c.b16 %v1006, %v1002
    %v1215 = vpack.c.b16 %v1007, %v1003
    %v1216 = vpack.c.b16 %v1008, %v1004
    %v1217 = vpack.c.b16 %v1013, %v1009
    %v1218 = vpack.c.b16 %v1014, %v1010
    %v1219 = vpack.c.b16 %v1015, %v1011
    %v1220 = vpack.c.b16 %v1016, %v1012
    %v1221 = vpack.c.b16 %v1021, %v1017
    %v1222 = vpack.c.b16 %v1022, %v1018
    %v1223 = vpack.c.b16 %v1023, %v1019
    %v1224 = vpack.c.b16 %v1024, %v1020
    %v1225 = vpack.c.b16 %v1029, %v1025
    %v1226 = vpack.c.b16 %v1030, %v1026
    %v1227 = vpack.c.b16 %v1031, %v1027
    %v1228 = vpack.c.b16 %v1032, %v1028
    %v1229 = vpack.c.b16 %v1037, %v1033
    %v1230 = vpack.c.b16 %v1038, %v1034
    %v1231 = vpack.c.b16 %v1039, %v1035
    %v1232 = vpack.c.b16 %v1040, %v1036
    %1425 = vmatprep.subr.bf16.mxu0 %v1070
    %1426 = vmatpush1.bf16.msra.mxu0 %v1069
    %1427 = vmatprep.subr.bf16.mxu0 %v1066
    %1428 = vmatpush1.bf16.msra.mxu0 %v1065
    %1429 = vmatprep.subr.bf16.mxu0 %v1062
    %1430 = vmatpush1.bf16.msra.mxu0 %v1061
    %1431 = vmatprep.subr.bf16.mxu0 %v1058
    %1432 = vmatpush1.bf16.msra.mxu0 %v1057
    %1433 = vmatprep.subr.bf16.mxu0 %v1054
    %1434 = vmatpush1.bf16.msra.mxu0 %v1053
    %1435 = vmatprep.subr.bf16.mxu0 %v1050
    %1436 = vmatpush1.bf16.msra.mxu0 %v1049
    %1437 = vmatprep.subr.bf16.mxu0 %v1046
    %1438 = vmatpush1.bf16.msra.mxu0 %v1045
    %1439 = vmatprep.subr.bf16.mxu0 %v1042
    %1440 = vmatpush1.bf16.msra.mxu0 %v1041
    %1441 = vmatprep.subr.bf16.mxu0 %v1102
    %1442 = vmatpush2.bf16.msra.mxu0 %v1101
    %1443 = vmatprep.subr.bf16.mxu0 %v1098
    %1444 = vmatpush2.bf16.msra.mxu0 %v1097
    %1445 = vmatprep.subr.bf16.mxu0 %v1094
    %1446 = vmatpush2.bf16.msra.mxu0 %v1093
    %1447 = vmatprep.subr.bf16.mxu0 %v1090
    %1448 = vmatpush2.bf16.msra.mxu0 %v1089
    %1449 = vmatprep.subr.bf16.mxu0 %v1086
    %1450 = vmatpush2.bf16.msra.mxu0 %v1085
    %1451 = vmatprep.subr.bf16.mxu0 %v1082
    %1452 = vmatpush2.bf16.msra.mxu0 %v1081
    %1453 = vmatprep.subr.bf16.mxu0 %v1078
    %1454 = vmatpush2.bf16.msra.mxu0 %v1077
    %1455 = vmatprep.subr.bf16.mxu0 %v1074
    %1456 = vmatpush2.bf16.msra.mxu0 %v1073
    %1457 = vmatprep.mubr.bf16.mxu0 %v454
    %1458 = vmatmul.mubr.bf16.gmra.mxu0 %v453
    %v1459 = vpop.f32.mrf.mxu0
    %v1460 = vadd.f32 0.0, %v1459
    %v1461 = vpop.f32.mrf.mxu0
    %v1462 = vadd.f32 0.0, %v1461
    %v1463 = vpop.f32.mrf.mxu0
    %v1464 = vpop.f32.mrf.mxu0
    %1465 = vdwg.mxu0
    %1466 = vmatprep.subr.bf16.mxu0 %v1134
    %1467 = vmatpush1.bf16.msra.mxu0 %v1133
    %1468 = vmatprep.subr.bf16.mxu0 %v1130
    %1469 = vmatpush1.bf16.msra.mxu0 %v1129
    %1470 = vmatprep.subr.bf16.mxu0 %v1126
    %1471 = vmatpush1.bf16.msra.mxu0 %v1125
    %1472 = vmatprep.subr.bf16.mxu0 %v1122
    %1473 = vmatpush1.bf16.msra.mxu0 %v1121
    %1474 = vmatprep.subr.bf16.mxu0 %v1118
    %1475 = vmatpush1.bf16.msra.mxu0 %v1117
    %1476 = vmatprep.subr.bf16.mxu0 %v1114
    %1477 = vmatpush1.bf16.msra.mxu0 %v1113
    %1478 = vmatprep.subr.bf16.mxu0 %v1110
    %1479 = vmatpush1.bf16.msra.mxu0 %v1109
    %1480 = vmatprep.subr.bf16.mxu0 %v1106
    %1481 = vmatpush1.bf16.msra.mxu0 %v1105
    %1482 = vmatprep.subr.bf16.mxu0 %v1166
    %1483 = vmatpush2.bf16.msra.mxu0 %v1165
    %1484 = vmatprep.subr.bf16.mxu0 %v1162
    %1485 = vmatpush2.bf16.msra.mxu0 %v1161
    %1486 = vmatprep.subr.bf16.mxu0 %v1158
    %1487 = vmatpush2.bf16.msra.mxu0 %v1157
    %1488 = vmatprep.subr.bf16.mxu0 %v1154
    %1489 = vmatpush2.bf16.msra.mxu0 %v1153
    %1490 = vmatprep.subr.bf16.mxu0 %v1150
    %1491 = vmatpush2.bf16.msra.mxu0 %v1149
    %1492 = vmatprep.subr.bf16.mxu0 %v1146
    %1493 = vmatpush2.bf16.msra.mxu0 %v1145
    %1494 = vmatprep.subr.bf16.mxu0 %v1142
    %1495 = vmatpush2.bf16.msra.mxu0 %v1141
    %1496 = vmatprep.subr.bf16.mxu0 %v1138
    %1497 = vmatpush2.bf16.msra.mxu0 %v1137
    %1498 = vmatprep.mubr.bf16.mxu0 %v456
    %1499 = vmatmul.mubr.bf16.gmra.mxu0 %v455
    %v1500 = vpop.f32.mrf.mxu0
    %v1501 = vadd.f32 %v1460, %v1500
    %v1502 = vpop.f32.mrf.mxu0
    %v1503 = vadd.f32 %v1462, %v1502
    %v1504 = vpop.f32.mrf.mxu0
    %v1505 = vpop.f32.mrf.mxu0
    %1506 = vdwg.mxu0
    %1507 = vmatprep.subr.bf16.mxu0 %v1198
    %1508 = vmatpush1.bf16.msra.mxu0 %v1197
    %1509 = vmatprep.subr.bf16.mxu0 %v1194
    %1510 = vmatpush1.bf16.msra.mxu0 %v1193
    %1511 = vmatprep.subr.bf16.mxu0 %v1190
    %1512 = vmatpush1.bf16.msra.mxu0 %v1189
    %1513 = vmatprep.subr.bf16.mxu0 %v1186
    %1514 = vmatpush1.bf16.msra.mxu0 %v1185
    %1515 = vmatprep.subr.bf16.mxu0 %v1182
    %1516 = vmatpush1.bf16.msra.mxu0 %v1181
    %1517 = vmatprep.subr.bf16.mxu0 %v1178
    %1518 = vmatpush1.bf16.msra.mxu0 %v1177
    %1519 = vmatprep.subr.bf16.mxu0 %v1174
    %1520 = vmatpush1.bf16.msra.mxu0 %v1173
    %1521 = vmatprep.subr.bf16.mxu0 %v1170
    %1522 = vmatpush1.bf16.msra.mxu0 %v1169
    %1523 = vmatprep.subr.bf16.mxu0 %v1230
    %1524 = vmatpush2.bf16.msra.mxu0 %v1229
    %1525 = vmatprep.subr.bf16.mxu0 %v1226
    %1526 = vmatpush2.bf16.msra.mxu0 %v1225
    %1527 = vmatprep.subr.bf16.mxu0 %v1222
    %1528 = vmatpush2.bf16.msra.mxu0 %v1221
    %1529 = vmatprep.subr.bf16.mxu0 %v1218
    %1530 = vmatpush2.bf16.msra.mxu0 %v1217
    %1531 = vmatprep.subr.bf16.mxu0 %v1214
    %1532 = vmatpush2.bf16.msra.mxu0 %v1213
    %1533 = vmatprep.subr.bf16.mxu0 %v1210
    %1534 = vmatpush2.bf16.msra.mxu0 %v1209
    %1535 = vmatprep.subr.bf16.mxu0 %v1206
    %1536 = vmatpush2.bf16.msra.mxu0 %v1205
    %1537 = vmatprep.subr.bf16.mxu0 %v1202
    %1538 = vmatpush2.bf16.msra.mxu0 %v1201
    %1539 = vmatprep.mubr.bf16.mxu0 %v458
    %1540 = vmatmul.mubr.bf16.gmra.mxu0 %v457
    %v1541 = vpop.f32.mrf.mxu0
    %v1542 = vadd.f32 %v1501, %v1541
    %v1543 = vpop.f32.mrf.mxu0
    %v1544 = vadd.f32 %v1503, %v1543
    %v1545 = vpop.f32.mrf.mxu0
    %v1546 = vpop.f32.mrf.mxu0
    %1547 = vdwg.mxu0
    %1548 = vmatprep.subr.bf16.mxu0 %v1072
    %1549 = vmatpush1.bf16.msra.mxu0 %v1071
    %1550 = vmatprep.subr.bf16.mxu0 %v1068
    %1551 = vmatpush1.bf16.msra.mxu0 %v1067
    %1552 = vmatprep.subr.bf16.mxu0 %v1064
    %1553 = vmatpush1.bf16.msra.mxu0 %v1063
    %1554 = vmatprep.subr.bf16.mxu0 %v1060
    %1555 = vmatpush1.bf16.msra.mxu0 %v1059
    %1556 = vmatprep.subr.bf16.mxu0 %v1056
    %1557 = vmatpush1.bf16.msra.mxu0 %v1055
    %1558 = vmatprep.subr.bf16.mxu0 %v1052
    %1559 = vmatpush1.bf16.msra.mxu0 %v1051
    %1560 = vmatprep.subr.bf16.mxu0 %v1048
    %1561 = vmatpush1.bf16.msra.mxu0 %v1047
    %1562 = vmatprep.subr.bf16.mxu0 %v1044
    %1563 = vmatpush1.bf16.msra.mxu0 %v1043
    %1564 = vmatprep.subr.bf16.mxu0 %v1104
    %1565 = vmatpush2.bf16.msra.mxu0 %v1103
    %1566 = vmatprep.subr.bf16.mxu0 %v1100
    %1567 = vmatpush2.bf16.msra.mxu0 %v1099
    %1568 = vmatprep.subr.bf16.mxu0 %v1096
    %1569 = vmatpush2.bf16.msra.mxu0 %v1095
    %1570 = vmatprep.subr.bf16.mxu0 %v1092
    %1571 = vmatpush2.bf16.msra.mxu0 %v1091
    %1572 = vmatprep.subr.bf16.mxu0 %v1088
    %1573 = vmatpush2.bf16.msra.mxu0 %v1087
    %1574 = vmatprep.subr.bf16.mxu0 %v1084
    %1575 = vmatpush2.bf16.msra.mxu0 %v1083
    %1576 = vmatprep.subr.bf16.mxu0 %v1080
    %1577 = vmatpush2.bf16.msra.mxu0 %v1079
    %1578 = vmatprep.subr.bf16.mxu0 %v1076
    %1579 = vmatpush2.bf16.msra.mxu0 %v1075
    %1580 = vmatprep.mubr.bf16.mxu0 %v454
    %1581 = vmatmul.mubr.bf16.gmra.mxu0 %v453
    %v1582 = vpop.f32.mrf.mxu0
    %v1583 = vadd.f32 0.0, %v1582
    %v1584 = vpop.f32.mrf.mxu0
    %v1585 = vadd.f32 0.0, %v1584
    %v1586 = vpop.f32.mrf.mxu0
    %v1587 = vpop.f32.mrf.mxu0
    %1588 = vdwg.mxu0
    %1589 = vmatprep.subr.bf16.mxu0 %v1136
    %1590 = vmatpush1.bf16.msra.mxu0 %v1135
    %1591 = vmatprep.subr.bf16.mxu0 %v1132
    %1592 = vmatpush1.bf16.msra.mxu0 %v1131
    %1593 = vmatprep.subr.bf16.mxu0 %v1128
    %1594 = vmatpush1.bf16.msra.mxu0 %v1127
    %1595 = vmatprep.subr.bf16.mxu0 %v1124
    %1596 = vmatpush1.bf16.msra.mxu0 %v1123
    %1597 = vmatprep.subr.bf16.mxu0 %v1120
    %1598 = vmatpush1.bf16.msra.mxu0 %v1119
    %1599 = vmatprep.subr.bf16.mxu0 %v1116
    %1600 = vmatpush1.bf16.msra.mxu0 %v1115
    %1601 = vmatprep.subr.bf16.mxu0 %v1112
    %1602 = vmatpush1.bf16.msra.mxu0 %v1111
    %1603 = vmatprep.subr.bf16.mxu0 %v1108
    %1604 = vmatpush1.bf16.msra.mxu0 %v1107
    %1605 = vmatprep.subr.bf16.mxu0 %v1168
    %1606 = vmatpush2.bf16.msra.mxu0 %v1167
    %1607 = vmatprep.subr.bf16.mxu0 %v1164
    %1608 = vmatpush2.bf16.msra.mxu0 %v1163
    %1609 = vmatprep.subr.bf16.mxu0 %v1160
    %1610 = vmatpush2.bf16.msra.mxu0 %v1159
    %1611 = vmatprep.subr.bf16.mxu0 %v1156
    %1612 = vmatpush2.bf16.msra.mxu0 %v1155
    %1613 = vmatprep.subr.bf16.mxu0 %v1152
    %1614 = vmatpush2.bf16.msra.mxu0 %v1151
    %1615 = vmatprep.subr.bf16.mxu0 %v1148
    %1616 = vmatpush2.bf16.msra.mxu0 %v1147
    %1617 = vmatprep.subr.bf16.mxu0 %v1144
    %1618 = vmatpush2.bf16.msra.mxu0 %v1143
    %1619 = vmatprep.subr.bf16.mxu0 %v1140
    %1620 = vmatpush2.bf16.msra.mxu0 %v1139
    %1621 = vmatprep.mubr.bf16.mxu0 %v456
    %1622 = vmatmul.mubr.bf16.gmra.mxu0 %v455
    %v1623 = vpop.f32.mrf.mxu0
    %v1624 = vadd.f32 %v1583, %v1623
    %v1625 = vpop.f32.mrf.mxu0
    %v1626 = vadd.f32 %v1585, %v1625
    %v1627 = vpop.f32.mrf.mxu0
    %v1628 = vpop.f32.mrf.mxu0
    %1629 = vdwg.mxu0
    %1630 = vmatprep.subr.bf16.mxu0 %v1200
    %1631 = vmatpush1.bf16.msra.mxu0 %v1199
    %1632 = vmatprep.subr.bf16.mxu0 %v1196
    %1633 = vmatpush1.bf16.msra.mxu0 %v1195
    %1634 = vmatprep.subr.bf16.mxu0 %v1192
    %1635 = vmatpush1.bf16.msra.mxu0 %v1191
    %1636 = vmatprep.subr.bf16.mxu0 %v1188
    %1637 = vmatpush1.bf16.msra.mxu0 %v1187
    %1638 = vmatprep.subr.bf16.mxu0 %v1184
    %1639 = vmatpush1.bf16.msra.mxu0 %v1183
    %1640 = vmatprep.subr.bf16.mxu0 %v1180
    %1641 = vmatpush1.bf16.msra.mxu0 %v1179
    %1642 = vmatprep.subr.bf16.mxu0 %v1176
    %1643 = vmatpush1.bf16.msra.mxu0 %v1175
    %1644 = vmatprep.subr.bf16.mxu0 %v1172
    %1645 = vmatpush1.bf16.msra.mxu0 %v1171
    %1646 = vmatprep.subr.bf16.mxu0 %v1232
    %1647 = vmatpush2.bf16.msra.mxu0 %v1231
    %1648 = vmatprep.subr.bf16.mxu0 %v1228
    %1649 = vmatpush2.bf16.msra.mxu0 %v1227
    %1650 = vmatprep.subr.bf16.mxu0 %v1224
    %1651 = vmatpush2.bf16.msra.mxu0 %v1223
    %1652 = vmatprep.subr.bf16.mxu0 %v1220
    %1653 = vmatpush2.bf16.msra.mxu0 %v1219
    %1654 = vmatprep.subr.bf16.mxu0 %v1216
    %1655 = vmatpush2.bf16.msra.mxu0 %v1215
    %1656 = vmatprep.subr.bf16.mxu0 %v1212
    %1657 = vmatpush2.bf16.msra.mxu0 %v1211
    %1658 = vmatprep.subr.bf16.mxu0 %v1208
    %1659 = vmatpush2.bf16.msra.mxu0 %v1207
    %1660 = vmatprep.subr.bf16.mxu0 %v1204
    %1661 = vmatpush2.bf16.msra.mxu0 %v1203
    %1662 = vmatprep.mubr.bf16.mxu0 %v458
    %1663 = vmatmul.mubr.bf16.gmra.mxu0 %v457
    %v1664 = vpop.f32.mrf.mxu0
    %v1665 = vadd.f32 %v1624, %v1664
    %v1666 = vpop.f32.mrf.mxu0
    %v1667 = vadd.f32 %v1626, %v1666
    %v1668 = vpop.f32.mrf.mxu0
    %v1669 = vpop.f32.mrf.mxu0
    %1670 = vdwg.mxu0
    %v1671 = vsel %vm335, %v1542, %v1665
    %v1672 = vsel %vm335, %v1544, %v1667
    %v1673 = vadd.f32 %v1671, %v358
    %v1674 = vadd.f32 %v1672, %v359
    %v1675 = vmul.f32 %v1673, 0.5
    %v1676 = vmul.f32 %v1674, 0.5
    %v1677 = vmul.f32 %v1673, 0.70710677
    %v1678 = vmul.f32 %v1674, 0.70710677
    %v1679 = verf.f32.pop %v1677
    %v1680 = verf.f32.pop %v1678
    %v1681 = vadd.f32 %v1679, 1.0
    %v1682 = vadd.f32 %v1680, 1.0
    %v1683 = vmul.f32 %v1675, %v1681
    %v1684 = vmul.f32 %v1676, %v1682
    %v1685 = vpack.c.bf16 %v1683, %v1683
    %v1686 = vpack.c.bf16 %v1684, %v1684
    %v1751 = vunpack.c.l.b16 %v264
    %v1752 = vunpack.c.h.b16 %v264
    %v1753 = vunpack.c.l.b16 %v265
    %v1754 = vunpack.c.h.b16 %v265
    %v1755 = vunpack.c.l.b16 %v266
    %v1756 = vunpack.c.h.b16 %v266
    %v1757 = vunpack.c.l.b16 %v267
    %v1758 = vunpack.c.h.b16 %v267
    %v1759 = vunpack.c.l.b16 %v268
    %v1760 = vunpack.c.h.b16 %v268
    %v1761 = vunpack.c.l.b16 %v269
    %v1762 = vunpack.c.h.b16 %v269
    %v1763 = vunpack.c.l.b16 %v270
    %v1764 = vunpack.c.h.b16 %v270
    %v1765 = vunpack.c.l.b16 %v271
    %v1766 = vunpack.c.h.b16 %v271
    %v1767 = vunpack.c.l.b16 %v272
    %v1768 = vunpack.c.h.b16 %v272
    %v1769 = vunpack.c.l.b16 %v273
    %v1770 = vunpack.c.h.b16 %v273
    %v1771 = vunpack.c.l.b16 %v274
    %v1772 = vunpack.c.h.b16 %v274
    %v1773 = vunpack.c.l.b16 %v275
    %v1774 = vunpack.c.h.b16 %v275
    %v1775 = vunpack.c.l.b16 %v276
    %v1776 = vunpack.c.h.b16 %v276
    %v1777 = vunpack.c.l.b16 %v277
    %v1778 = vunpack.c.h.b16 %v277
    %v1779 = vunpack.c.l.b16 %v278
    %v1780 = vunpack.c.h.b16 %v278
    %v1781 = vunpack.c.l.b16 %v279
    %v1782 = vunpack.c.h.b16 %v279
    %v1783 = vunpack.c.l.b16 %v280
    %v1784 = vunpack.c.h.b16 %v280
    %v1785 = vunpack.c.l.b16 %v281
    %v1786 = vunpack.c.h.b16 %v281
    %v1787 = vunpack.c.l.b16 %v282
    %v1788 = vunpack.c.h.b16 %v282
    %v1789 = vunpack.c.l.b16 %v283
    %v1790 = vunpack.c.h.b16 %v283
    %v1791 = vunpack.c.l.b16 %v284
    %v1792 = vunpack.c.h.b16 %v284
    %v1793 = vunpack.c.l.b16 %v285
    %v1794 = vunpack.c.h.b16 %v285
    %v1795 = vunpack.c.l.b16 %v286
    %v1796 = vunpack.c.h.b16 %v286
    %v1797 = vunpack.c.l.b16 %v287
    %v1798 = vunpack.c.h.b16 %v287
    %v1799 = vunpack.c.l.b16 %v288
    %v1800 = vunpack.c.h.b16 %v288
    %v1801 = vunpack.c.l.b16 %v289
    %v1802 = vunpack.c.h.b16 %v289
    %v1803 = vunpack.c.l.b16 %v290
    %v1804 = vunpack.c.h.b16 %v290
    %v1805 = vunpack.c.l.b16 %v291
    %v1806 = vunpack.c.h.b16 %v291
    %v1807 = vunpack.c.l.b16 %v292
    %v1808 = vunpack.c.h.b16 %v292
    %v1809 = vunpack.c.l.b16 %v293
    %v1810 = vunpack.c.h.b16 %v293
    %v1811 = vunpack.c.l.b16 %v294
    %v1812 = vunpack.c.h.b16 %v294
    %v1813 = vunpack.c.l.b16 %v295
    %v1814 = vunpack.c.h.b16 %v295
    %v1815 = vunpack.c.l.b16 %v296
    %v1816 = vunpack.c.h.b16 %v296
    %v1817 = vunpack.c.l.b16 %v297
    %v1818 = vunpack.c.h.b16 %v297
    %v1819 = vunpack.c.l.b16 %v298
    %v1820 = vunpack.c.h.b16 %v298
    %v1821 = vunpack.c.l.b16 %v299
    %v1822 = vunpack.c.h.b16 %v299
    %v1823 = vunpack.c.l.b16 %v300
    %v1824 = vunpack.c.h.b16 %v300
    %v1825 = vunpack.c.l.b16 %v301
    %v1826 = vunpack.c.h.b16 %v301
    %v1827 = vunpack.c.l.b16 %v302
    %v1828 = vunpack.c.h.b16 %v302
    %v1829 = vunpack.c.l.b16 %v303
    %v1830 = vunpack.c.h.b16 %v303
    %v1831 = vunpack.c.l.b16 %v304
    %v1832 = vunpack.c.h.b16 %v304
    %v1833 = vunpack.c.l.b16 %v305
    %v1834 = vunpack.c.h.b16 %v305
    %v1835 = vunpack.c.l.b16 %v306
    %v1836 = vunpack.c.h.b16 %v306
    %v1837 = vunpack.c.l.b16 %v307
    %v1838 = vunpack.c.h.b16 %v307
    %v1839 = vunpack.c.l.b16 %v308
    %v1840 = vunpack.c.h.b16 %v308
    %v1841 = vunpack.c.l.b16 %v309
    %v1842 = vunpack.c.h.b16 %v309
    %v1843 = vunpack.c.l.b16 %v310
    %v1844 = vunpack.c.h.b16 %v310
    %v1845 = vunpack.c.l.b16 %v311
    %v1846 = vunpack.c.h.b16 %v311
    %v1847 = vunpack.c.l.b16 %v312
    %v1848 = vunpack.c.h.b16 %v312
    %v1849 = vunpack.c.l.b16 %v313
    %v1850 = vunpack.c.h.b16 %v313
    %v1851 = vunpack.c.l.b16 %v314
    %v1852 = vunpack.c.h.b16 %v314
    %v1853 = vunpack.c.l.b16 %v315
    %v1854 = vunpack.c.h.b16 %v315
    %v1855 = vunpack.c.l.b16 %v316
    %v1856 = vunpack.c.h.b16 %v316
    %v1857 = vunpack.c.l.b16 %v317
    %v1858 = vunpack.c.h.b16 %v317
    %v1859 = vunpack.c.l.b16 %v318
    %v1860 = vunpack.c.h.b16 %v318
    %v1861 = vunpack.c.l.b16 %v319
    %v1862 = vunpack.c.h.b16 %v319
    %v1863 = vunpack.c.l.b16 %v320
    %v1864 = vunpack.c.h.b16 %v320
    %v1865 = vunpack.c.l.b16 %v321
    %v1866 = vunpack.c.h.b16 %v321
    %v1867 = vunpack.c.l.b16 %v322
    %v1868 = vunpack.c.h.b16 %v322
    %v1869 = vunpack.c.l.b16 %v323
    %v1870 = vunpack.c.h.b16 %v323
    %v1871 = vunpack.c.l.b16 %v324
    %v1872 = vunpack.c.h.b16 %v324
    %v1873 = vunpack.c.l.b16 %v325
    %v1874 = vunpack.c.h.b16 %v325
    %v1875 = vunpack.c.l.b16 %v326
    %v1876 = vunpack.c.h.b16 %v326
    %v1877 = vunpack.c.l.b16 %v327
    %v1878 = vunpack.c.h.b16 %v327
    %v1879 = vpack.c.b16 %v1755, %v1751
    %v1880 = vpack.c.b16 %v1756, %v1752
    %v1881 = vpack.c.b16 %v1757, %v1753
    %v1882 = vpack.c.b16 %v1758, %v1754
    %v1883 = vpack.c.b16 %v1763, %v1759
    %v1884 = vpack.c.b16 %v1764, %v1760
    %v1885 = vpack.c.b16 %v1765, %v1761
    %v1886 = vpack.c.b16 %v1766, %v1762
    %v1887 = vpack.c.b16 %v1771, %v1767
    %v1888 = vpack.c.b16 %v1772, %v1768
    %v1889 = vpack.c.b16 %v1773, %v1769
    %v1890 = vpack.c.b16 %v1774, %v1770
    %v1891 = vpack.c.b16 %v1779, %v1775
    %v1892 = vpack.c.b16 %v1780, %v1776
    %v1893 = vpack.c.b16 %v1781, %v1777
    %v1894 = vpack.c.b16 %v1782, %v1778
    %v1895 = vpack.c.b16 %v1787, %v1783
    %v1896 = vpack.c.b16 %v1788, %v1784
    %v1897 = vpack.c.b16 %v1789, %v1785
    %v1898 = vpack.c.b16 %v1790, %v1786
    %v1899 = vpack.c.b16 %v1795, %v1791
    %v1900 = vpack.c.b16 %v1796, %v1792
    %v1901 = vpack.c.b16 %v1797, %v1793
    %v1902 = vpack.c.b16 %v1798, %v1794
    %v1903 = vpack.c.b16 %v1803, %v1799
    %v1904 = vpack.c.b16 %v1804, %v1800
    %v1905 = vpack.c.b16 %v1805, %v1801
    %v1906 = vpack.c.b16 %v1806, %v1802
    %v1907 = vpack.c.b16 %v1811, %v1807
    %v1908 = vpack.c.b16 %v1812, %v1808
    %v1909 = vpack.c.b16 %v1813, %v1809
    %v1910 = vpack.c.b16 %v1814, %v1810
    %v1911 = vpack.c.b16 %v1819, %v1815
    %v1912 = vpack.c.b16 %v1820, %v1816
    %v1913 = vpack.c.b16 %v1821, %v1817
    %v1914 = vpack.c.b16 %v1822, %v1818
    %v1915 = vpack.c.b16 %v1827, %v1823
    %v1916 = vpack.c.b16 %v1828, %v1824
    %v1917 = vpack.c.b16 %v1829, %v1825
    %v1918 = vpack.c.b16 %v1830, %v1826
    %v1919 = vpack.c.b16 %v1835, %v1831
    %v1920 = vpack.c.b16 %v1836, %v1832
    %v1921 = vpack.c.b16 %v1837, %v1833
    %v1922 = vpack.c.b16 %v1838, %v1834
    %v1923 = vpack.c.b16 %v1843, %v1839
    %v1924 = vpack.c.b16 %v1844, %v1840
    %v1925 = vpack.c.b16 %v1845, %v1841
    %v1926 = vpack.c.b16 %v1846, %v1842
    %v1927 = vpack.c.b16 %v1851, %v1847
    %v1928 = vpack.c.b16 %v1852, %v1848
    %v1929 = vpack.c.b16 %v1853, %v1849
    %v1930 = vpack.c.b16 %v1854, %v1850
    %v1931 = vpack.c.b16 %v1859, %v1855
    %v1932 = vpack.c.b16 %v1860, %v1856
    %v1933 = vpack.c.b16 %v1861, %v1857
    %v1934 = vpack.c.b16 %v1862, %v1858
    %v1935 = vpack.c.b16 %v1867, %v1863
    %v1936 = vpack.c.b16 %v1868, %v1864
    %v1937 = vpack.c.b16 %v1869, %v1865
    %v1938 = vpack.c.b16 %v1870, %v1866
    %v1939 = vpack.c.b16 %v1875, %v1871
    %v1940 = vpack.c.b16 %v1876, %v1872
    %v1941 = vpack.c.b16 %v1877, %v1873
    %v1942 = vpack.c.b16 %v1878, %v1874
    %2007 = vmatprep.subr.bf16.mxu0 %v1908
    %2008 = vmatpush1.bf16.msra.mxu0 %v1907
    %2009 = vmatprep.subr.bf16.mxu0 %v1904
    %2010 = vmatpush1.bf16.msra.mxu0 %v1903
    %2011 = vmatprep.subr.bf16.mxu0 %v1900
    %2012 = vmatpush1.bf16.msra.mxu0 %v1899
    %2013 = vmatprep.subr.bf16.mxu0 %v1896
    %2014 = vmatpush1.bf16.msra.mxu0 %v1895
    %2015 = vmatprep.subr.bf16.mxu0 %v1892
    %2016 = vmatpush1.bf16.msra.mxu0 %v1891
    %2017 = vmatprep.subr.bf16.mxu0 %v1888
    %2018 = vmatpush1.bf16.msra.mxu0 %v1887
    %2019 = vmatprep.subr.bf16.mxu0 %v1884
    %2020 = vmatpush1.bf16.msra.mxu0 %v1883
    %2021 = vmatprep.subr.bf16.mxu0 %v1880
    %2022 = vmatpush1.bf16.msra.mxu0 %v1879
    %2023 = vmatprep.subr.bf16.mxu0 %v1940
    %2024 = vmatpush2.bf16.msra.mxu0 %v1939
    %2025 = vmatprep.subr.bf16.mxu0 %v1936
    %2026 = vmatpush2.bf16.msra.mxu0 %v1935
    %2027 = vmatprep.subr.bf16.mxu0 %v1932
    %2028 = vmatpush2.bf16.msra.mxu0 %v1931
    %2029 = vmatprep.subr.bf16.mxu0 %v1928
    %2030 = vmatpush2.bf16.msra.mxu0 %v1927
    %2031 = vmatprep.subr.bf16.mxu0 %v1924
    %2032 = vmatpush2.bf16.msra.mxu0 %v1923
    %2033 = vmatprep.subr.bf16.mxu0 %v1920
    %2034 = vmatpush2.bf16.msra.mxu0 %v1919
    %2035 = vmatprep.subr.bf16.mxu0 %v1916
    %2036 = vmatpush2.bf16.msra.mxu0 %v1915
    %2037 = vmatprep.subr.bf16.mxu0 %v1912
    %2038 = vmatpush2.bf16.msra.mxu0 %v1911
    %2039 = vmatprep.mubr.bf16.mxu0 %v1686
    %2040 = vmatmul.mubr.bf16.gmra.mxu0 %v1685
    %v2041 = vpop.f32.mrf.mxu0
    %v2042 = vadd.f32 0.0, %v2041
    %v2043 = vpop.f32.mrf.mxu0
    %v2044 = vadd.f32 0.0, %v2043
    %v2045 = vpop.f32.mrf.mxu0
    %v2046 = vpop.f32.mrf.mxu0
    %2047 = vdwg.mxu0
    %2048 = vmatprep.subr.bf16.mxu0 %v1910
    %2049 = vmatpush1.bf16.msra.mxu0 %v1909
    %2050 = vmatprep.subr.bf16.mxu0 %v1906
    %2051 = vmatpush1.bf16.msra.mxu0 %v1905
    %2052 = vmatprep.subr.bf16.mxu0 %v1902
    %2053 = vmatpush1.bf16.msra.mxu0 %v1901
    %2054 = vmatprep.subr.bf16.mxu0 %v1898
    %2055 = vmatpush1.bf16.msra.mxu0 %v1897
    %2056 = vmatprep.subr.bf16.mxu0 %v1894
    %2057 = vmatpush1.bf16.msra.mxu0 %v1893
    %2058 = vmatprep.subr.bf16.mxu0 %v1890
    %2059 = vmatpush1.bf16.msra.mxu0 %v1889
    %2060 = vmatprep.subr.bf16.mxu0 %v1886
    %2061 = vmatpush1.bf16.msra.mxu0 %v1885
    %2062 = vmatprep.subr.bf16.mxu0 %v1882
    %2063 = vmatpush1.bf16.msra.mxu0 %v1881
    %2064 = vmatprep.subr.bf16.mxu0 %v1942
    %2065 = vmatpush2.bf16.msra.mxu0 %v1941
    %2066 = vmatprep.subr.bf16.mxu0 %v1938
    %2067 = vmatpush2.bf16.msra.mxu0 %v1937
    %2068 = vmatprep.subr.bf16.mxu0 %v1934
    %2069 = vmatpush2.bf16.msra.mxu0 %v1933
    %2070 = vmatprep.subr.bf16.mxu0 %v1930
    %2071 = vmatpush2.bf16.msra.mxu0 %v1929
    %2072 = vmatprep.subr.bf16.mxu0 %v1926
    %2073 = vmatpush2.bf16.msra.mxu0 %v1925
    %2074 = vmatprep.subr.bf16.mxu0 %v1922
    %2075 = vmatpush2.bf16.msra.mxu0 %v1921
    %2076 = vmatprep.subr.bf16.mxu0 %v1918
    %2077 = vmatpush2.bf16.msra.mxu0 %v1917
    %2078 = vmatprep.subr.bf16.mxu0 %v1914
    %2079 = vmatpush2.bf16.msra.mxu0 %v1913
    %2080 = vmatprep.mubr.bf16.mxu0 %v1686
    %2081 = vmatmul.mubr.bf16.gmra.mxu0 %v1685
    %v2082 = vpop.f32.mrf.mxu0
    %v2083 = vadd.f32 0.0, %v2082
    %v2084 = vpop.f32.mrf.mxu0
    %v2085 = vadd.f32 0.0, %v2084
    %v2086 = vpop.f32.mrf.mxu0
    %v2087 = vpop.f32.mrf.mxu0
    %2088 = vdwg.mxu0
    %v2089 = vsel %vm335, %v2042, %v2083
    %v2090 = vsel %vm335, %v2044, %v2085
    %v2091 = vadd.f32 %v2089, %v386
    %v2092 = vadd.f32 %v2090, %v387
    %v2093 = vadd.f32 %v2091, %v1673
    %v2094 = vadd.f32 %v2092, %v1674
    %v2095 = vadd.f32 %v2093, %v2094
    %2096 = vadd.xlane.f32.xlu0 %v2095
    %v2097 = vpop.xlane.xlu0 %2096
    %v2098 = vrcp.pop 256.0
    %v2099 = vmul.f32 %v2097, %v2098
    %v2100 = vsub.f32 %v2093, %v2099
    %v2101 = vsub.f32 %v2094, %v2099
    %v2102 = vmul.f32 %v2100, %v2100
    %v2103 = vmul.f32 %v2101, %v2101
    %v2104 = vadd.f32 %v2102, %v2103
    %2105 = vadd.xlane.f32.xlu0 %v2104
    %v2106 = vpop.xlane.xlu0 %2105
    %v2107 = vmul.f32 %v2106, %v2098
    %v2108 = vadd.f32 %v2107, 1e-05
    %v2109 = vrsqrt.pop %v2108
    %v2110 = vmul.f32 %v2100, %v2109
    %v2111 = vmul.f32 %v2101, %v2109
    %v2112 = vmul.f32 %v2110, %v414
    %v2113 = vmul.f32 %v2111, %v415
    %v2114 = vadd.f32 %v2112, %v442
    %v2115 = vadd.f32 %v2113, %v443
    %2116 = vmatprep.subr.mxu0 0.0
    %2117 = vmatpush1.xpose.msra.mxu0 0.0
    %2118 = vmatprep.subr.mxu0 0.0
    %2119 = vmatpush1.xpose.msra.mxu0 0.0
    %2120 = vmatprep.subr.mxu0 0.0
    %2121 = vmatpush1.xpose.msra.mxu0 0.0
    %2122 = vmatprep.subr.mxu0 0.0
    %2123 = vmatpush1.xpose.msra.mxu0 0.0
    %2124 = vmatprep.subr.mxu0 0.0
    %2125 = vmatpush1.xpose.msra.mxu0 0.0
    %2126 = vmatprep.subr.mxu0 0.0
    %2127 = vmatpush1.xpose.msra.mxu0 0.0
    %2128 = vmatprep.subr.mxu0 0.0
    %2129 = vmatpush1.xpose.msra.mxu0 0.0
    %2130 = vmatprep.subr.mxu0 0.0
    %2131 = vmatpush1.xpose.msra.mxu0 0.0
    %2132 = vmatprep.subr.mxu0 0.0
    %2133 = vmatpush1.xpose.msra.mxu0 0.0
    %2134 = vmatprep.subr.mxu0 0.0
    %2135 = vmatpush1.xpose.msra.mxu0 0.0
    %2136 = vmatprep.subr.mxu0 0.0
    %2137 = vmatpush1.xpose.msra.mxu0 0.0
    %2138 = vmatprep.subr.mxu0 0.0
    %2139 = vmatpush1.xpose.msra.mxu0 0.0
    %2140 = vmatprep.subr.mxu0 0.0
    %2141 = vmatpush1.xpose.msra.mxu0 0.0
    %2142 = vmatprep.subr.mxu0 0.0
    %2143 = vmatpush1.xpose.msra.mxu0 0.0
    %2144 = vmatprep.subr.mxu0 0.0
    %2145 = vmatpush1.xpose.msra.mxu0 0.0
    %2146 = vmatprep.subr.mxu0 %v2115
    %2147 = vmatpush1.xpose.msra.mxu0 %v2114
    %2148 = vmatprep.subr.mxu0 0.0
    %2149 = vmatpush2.xpose.msra.mxu0 0.0
    %2150 = vmatprep.subr.mxu0 0.0
    %2151 = vmatpush2.xpose.msra.mxu0 0.0
    %2152 = vmatprep.subr.mxu0 0.0
    %2153 = vmatpush2.xpose.msra.mxu0 0.0
    %2154 = vmatprep.subr.mxu0 0.0
    %2155 = vmatpush2.xpose.msra.mxu0 0.0
    %2156 = vmatprep.subr.mxu0 0.0
    %2157 = vmatpush2.xpose.msra.mxu0 0.0
    %2158 = vmatprep.subr.mxu0 0.0
    %2159 = vmatpush2.xpose.msra.mxu0 0.0
    %2160 = vmatprep.subr.mxu0 0.0
    %2161 = vmatpush2.xpose.msra.mxu0 0.0
    %2162 = vmatprep.subr.mxu0 0.0
    %2163 = vmatpush2.xpose.msra.mxu0 0.0
    %2164 = vmatprep.subr.mxu0 0.0
    %2165 = vmatpush2.xpose.msra.mxu0 0.0
    %2166 = vmatprep.subr.mxu0 0.0
    %2167 = vmatpush2.xpose.msra.mxu0 0.0
    %2168 = vmatprep.subr.mxu0 0.0
    %2169 = vmatpush2.xpose.msra.mxu0 0.0
    %2170 = vmatprep.subr.mxu0 0.0
    %2171 = vmatpush2.xpose.msra.mxu0 0.0
    %2172 = vmatprep.subr.mxu0 0.0
    %2173 = vmatpush2.xpose.msra.mxu0 0.0
    %2174 = vmatprep.subr.mxu0 0.0
    %2175 = vmatpush2.xpose.msra.mxu0 0.0
    %2176 = vmatprep.subr.mxu0 0.0
    %2177 = vmatpush2.xpose.msra.mxu0 0.0
    %2178 = vmatprep.subr.mxu0 0.0
    %2179 = vmatpush2.xpose.msra.mxu0 0.0
    %2180 = vmatprep.mubr.f32.mxu0 %v2115
    %2181 = vmatmul.mubr.f32.gmra.mxu0 %v2114
    %v2182 = vpop.f32.mrf.mxu0
    %v2183 = vadd.f32 0.0, %v2182
    %v2184 = vpop.f32.mrf.mxu0
    %2185 = vdwg.mxu0
    %v2187 = vrot.slane %v2183, 4
    %2188 = vrot.lane.b32.xlu0 %v2187, 124
    %v2189 = vpop.permute.xlu0 %2188
    %v2191 = vadd.f32 %v2183, %v2189
    %v2192 = vmul.f32 %v2191, 0.5
    %vm2193 = vcmask 27648
    %v2194 = vsel %vm2193, %v2192, -inf
    %2195 = vmax.xlane.f32.xlu0 %v2194
    %v2196 = vpop.xlane.xlu0 %2195
    %v2197 = vsub.f32 %v2192, %v2196
    %v2198 = vmul.f32 %v2197, 1.442695
    %v2199 = vpow.pop %v2198
    %v2200 = vsel %vm2193, %v2199, 0.0
    %2201 = vadd.xlane.f32.xlu0 %v2200
    %v2202 = vpop.xlane.xlu0 %2201
    %v2203 = vrcp.pop %v2202
    %v2204 = vmul.f32 %v2199, %v2203
    %v2205 = vsub.f32 0.0, %v2204
    %vm2206 = vcmask 31748
    %v2207 = vsel %vm2206, %v2183, -inf
    %2208 = vmax.xlane.f32.xlu0 %v2207
    %v2209 = vpop.xlane.xlu0 %2208
    %v2210 = vsub.f32 %v2183, %v2209
    %v2211 = vmul.f32 %v2210, 1.442695
    %v2212 = vpow.pop %v2211
    %v2213 = vsel %vm2206, %v2212, 0.0
    %2214 = vadd.xlane.f32.xlu0 %v2213
    %v2215 = vpop.xlane.xlu0 %2214
    %v2216 = vlog2.pop %v2215
    %v2217 = vmul.f32 %v2216, 0.6931472
    %v2218 = vsub.f32 %v2210, %v2217
    %v2220 = vrot.slane %v2218, 4
    %v2222 = vmul.f32 %v2205, %v2220
    %v2223 = vsel %vm2193, %v2222, 0.0
    %2224 = vadd.xlane.f32.xlu0 %v2223
    %v2225 = vpop.xlane.xlu0 %2224
    %v2226 = vrot.slane %v2225, 4
    %v2227 = vadd.f32 %v2225, %v2226
    %v2228 = vrot.slane %v2227, 2
    %v2229 = vadd.f32 %v2227, %v2228
    %v2230 = vrot.slane %v2229, 1
    %v2231 = vadd.f32 %v2229, %v2230
    %s2232 = vtos %v2231
    %v2233 = vrot.slane %v2207, 4
    %v2234 = vmax.f32 %v2207, %v2233
    %v2235 = vrot.slane %v2234, 2
    %v2236 = vmax.f32 %v2234, %v2235
    %v2237 = vrot.slane %v2236, 1
    %v2238 = vmax.f32 %v2236, %v2237
    %v2239 = vsub.f32 %v2183, %v2238
    %v2240 = vmul.f32 %v2239, 1.442695
    %v2241 = vpow.pop %v2240
    %v2243 = vrot.slane %v2241, 4
    %v2245 = vsel %vm2193, %v2243, 0.0
    %v2246 = vrot.slane %v2245, 4
    %v2247 = vadd.f32 %v2245, %v2246
    %v2248 = vrot.slane %v2247, 2
    %v2249 = vadd.f32 %v2247, %v2248
    %v2250 = vrot.slane %v2249, 1
    %v2251 = vadd.f32 %v2249, %v2250
    %v2252 = vlog2.pop %v2251
    %v2253 = vmul.f32 %v2252, 0.6931472
    %v2254 = vsub.f32 %v2239, %v2253
    %v2256 = vrot.slane %v2254, 4
    %v2258 = vmul.f32 %v2205, %v2256
    %v2259 = vsel %vm2193, %v2258, 0.0
    %2260 = vadd.xlane.f32.xlu0 %v2259
    %v2261 = vpop.xlane.xlu0 %2260
    %v2262 = vrot.slane %v2261, 4
    %v2263 = vadd.f32 %v2261, %v2262
    %v2264 = vrot.slane %v2263, 2
    %v2265 = vadd.f32 %v2263, %v2264
    %v2266 = vrot.slane %v2265, 1
    %v2267 = vadd.f32 %v2265, %v2266
    %s2268 = vtos %v2267
    %s2269 = sadd.f32 %s2232, %s2268
    %s2270 = smul.f32 %s2269, 0.125
    %s2271 = smul.u32 0, 128
    %s2272 = scalar_lea.smem [#allocation10], %s2271
    %2273 = sst [smem:[%s2272]] %s2270
    // Predicated region
    $region34: #{tpu_custom_call.1} parent=1 // pred_check
      _
    $region35: #{tpu_custom_call.1} parent=1 // pred_check_branch
      %2275 = sbr.rel (0) target = $region37
    $region36: #{tpu_custom_call.1} parent=1 // pred_region
      %s2277 = ssub.s32 16, 16
      %2278 = vsyncadd [#allocation4], %s2277
      %2281 = dma.smem_to_hbm [#allocation10], 16, %s4, [#allocation4]
    $region37: #{tpu_custom_call.1} parent=1 // pred_fallthru
      _
    // Predicated region
    $region38: #{tpu_custom_call.1} parent=1 // pred_check
      _
    $region39: #{tpu_custom_call.1} parent=1 // pred_check_branch
      %2283 = sbr.rel (0) target = $region41
    $region40: #{tpu_custom_call.1} parent=1 // pred_region
      %2284 = dma.done [#allocation4], 16
    $region41: #{tpu_custom_call.1} parent=1 // pred_fallthru
      _
    %2285 = sfence
    %2286 = vsyncpa [#allocation3], 1
    %2287 = vsyncpa [#allocation6], 1
    %2288 = vsyncpa [#allocation9], 1
    %2289 = vsyncpa [#allocation4], 1

</llo_original>
